<compile_context>
chip_gen: v7x
topology: tpu7x:2x2x1
jax: 0.10.0
libtpu: 0.0.40
codegen_flags: <defaults>
</compile_context>

<pallas_src>
import functools

import jax
import jax.numpy as jnp
from jax.experimental import pallas as pl
from jax.experimental.pallas import tpu as pltpu

_LANE = 128


def _use_bf16_exp() -> bool:
    """bf16 EUP exists on v6e/v7x; v2-v5 would emulate it (slower) -> keep f32."""
    try:
        kind = jax.devices()[0].device_kind.lower()
    except Exception:
        return False
    return not any(t in kind for t in ("v2", "v3", "v4", "v5"))


def _choose_bb(B: int, N: int) -> int:
    """Batch elements per grid step.

    (a) keep the (Bb*4, N, N) f32 score buffer under a ~6 MiB VMEM budget,
    (b) cap at 8 (perf-review guidance),
    (c) keep >= 2 grid steps when B >= 2 (two v7x TensorCores),
    (d) Bb must divide B exactly.
    """
    budget = 6 * 1024 * 1024
    per_b = 4 * N * N * 4
    cap = max(1, min(8, budget // max(per_b, 1)))
    if B >= 2:
        cap = min(cap, max(1, B // 2))
    bb = 1
    for d in range(1, cap + 1):
        if B % d == 0:
            bb = d
    return bb


def _nonlocal_kernel(x_ref, wtpg_ref, btpg_ref, ww_ref, bw_ref, o_ref, *, bf16_exp):
    # x_ref block: (Bb, 4, N, C) — Bb batch elements, all four quadrants each.
    Bb, Q, N, C = x_ref.shape
    Cp = ww_ref.shape[0]                                   # padded inter-channels (128)

    x2 = x_ref[...].astype(jnp.float32).reshape(Bb * Q * N, C)

    # Fused, zero-padded theta|phi|g projection: one (Bb*4*N, C)@(C, 3*Cp)
    # matmul; bf16 operands (weights pre-cast on host), f32 accumulation.
    proj = jnp.dot(x2.astype(jnp.bfloat16), wtpg_ref[...],
                   preferred_element_type=jnp.float32) + btpg_ref[...]
    proj = proj.reshape(Bb * Q, N, 3 * Cp)
    theta = proj[:, :, 0 * Cp:1 * Cp].astype(jnp.bfloat16)  # whole-vreg lane slices
    phi   = proj[:, :, 1 * Cp:2 * Cp].astype(jnp.bfloat16)
    g     = proj[:, :, 2 * Cp:3 * Cp].astype(jnp.bfloat16)

    # Embedded-Gaussian attention, batched over the Bb*4 quadrant axis; the
    # einsum contracts the lane-aligned 128-deep feature axis of both operands.
    f = jnp.einsum('qnd,qmd->qnm', theta, phi,
                   preferred_element_type=jnp.float32)       # (Bb*4, N, N)
    f = f - jnp.max(f, axis=-1, keepdims=True)
    if bf16_exp:                                             # v6e/v7x: bf16 EUP
        p = jnp.exp(f.astype(jnp.bfloat16))
        denom = jnp.sum(p.astype(jnp.float32), axis=-1, keepdims=True)
    else:                                                    # v5e and older: f32 path
        pf = jnp.exp(f)
        denom = jnp.sum(pf, axis=-1, keepdims=True)
        p = pf.astype(jnp.bfloat16)

    # Deferred softmax normalization: matmul with un-normalized p, then one
    # cheap EUP reciprocal-scale on the small (Bb*4, N, Cp) result.
    y = jnp.einsum('qnm,qmd->qnd', p, g,
                   preferred_element_type=jnp.float32)
    y = y * pl.reciprocal(denom, approx=True)

    # W: 1x1 conv back to C channels (eval-mode BatchNorm folded in) + residual.
    wy = jnp.dot(y.reshape(Bb * Q * N, Cp).astype(jnp.bfloat16), ww_ref[...],
                 preferred_element_type=jnp.float32) + bw_ref[...]
    o_ref[...] = (wy + x2).reshape(Bb, Q, N, C).astype(o_ref.dtype)


@functools.partial(jax.jit, static_argnames=("bf16_exp",))
def _nonlocal_ca_forward(x, params, bf16_exp):
    """x: (B, C, H, W) float32 (NCHW, same as the PyTorch module)."""
    B, C, H, W = x.shape
    H1, W1 = H // 2, W // 2
    N = H1 * W1
    Ci = params["wg"].shape[1]
    Cp = ((Ci + _LANE - 1) // _LANE) * _LANE
    Bb = _choose_bb(B, N)

    # Host-side parameter fusion (tiny, fused under jit):
    #   * theta|phi|g weights zero-padded to Cp lanes, fused -> (C, 3*Cp) bf16
    #   * eval-mode BatchNorm folded into the W conv; W rows zero-padded to Cp.
    pad_c = lambda w: jnp.pad(w, ((0, 0), (0, Cp - Ci)))
    wtpg = jnp.concatenate([pad_c(params["wth"]), pad_c(params["wph"]),
                            pad_c(params["wg"])], axis=1).astype(jnp.bfloat16)
    btpg = jnp.concatenate([pad_c(params["bth"]), pad_c(params["bph"]),
                            pad_c(params["bg"])], axis=1)                    # f32
    ww = jnp.pad(params["ww"] * params["bn_scale"],
                 ((0, Cp - Ci), (0, 0))).astype(jnp.bfloat16)
    bw = params["bw"] * params["bn_scale"] + params["bn_shift"]              # f32

    # NCHW -> (B, 4 quadrants, N, C): the single channels-last layout pass
    # (required for NCHW inputs anyway); quadrant grouping rides along free.
    xq = (x.reshape(B, C, 2, H1, 2, W1)
            .transpose(0, 2, 4, 3, 5, 1)           # (B, qh, qw, H1, W1, C)
            .reshape(B, 4, N, C))

    kernel = functools.partial(_nonlocal_kernel, bf16_exp=bf16_exp)
    out = pl.pallas_call(
        kernel,
        out_shape=jax.ShapeDtypeStruct((B, 4, N, C), x.dtype),
        grid_spec=pltpu.PrefetchScalarGridSpec(
            num_scalar_prefetch=0,
            grid=(B // Bb,),
            in_specs=[
                pl.BlockSpec((Bb, 4, N, C), lambda b: (b, 0, 0, 0)),  # Bb batch slab
                pl.BlockSpec((C, 3 * Cp), lambda b: (0, 0)),          # fused th|ph|g w (bf16)
                pl.BlockSpec((1, 3 * Cp), lambda b: (0, 0)),          # fused th|ph|g bias
                pl.BlockSpec((Cp, C), lambda b: (0, 0)),              # W weight (BN folded, bf16)
                pl.BlockSpec((1, C), lambda b: (0, 0)),               # W bias   (BN folded)
            ],
            out_specs=pl.BlockSpec((Bb, 4, N, C), lambda b: (b, 0, 0, 0)),
        ),
        compiler_params=pltpu.CompilerParams(
            dimension_semantics=("parallel",)),
    )(xq, wtpg, btpg, ww, bw)

    # reassemble quadrants back into (B, C, H, W)
    z = (out.reshape(B, 2, 2, H1, W1, C)
            .transpose(0, 5, 1, 3, 2, 4)            # (B, C, qh, H1, qw, W1)
            .reshape(B, C, H, W))
    return z


def nonlocal_ca_forward(x, params):
    return _nonlocal_ca_forward(x, params, _use_bf16_exp())


def init_params(key, in_feat=64, inter_feat=32):
    """Deterministic init; conv weights stored as (in, out) channel matrices."""
    ks = jax.random.split(key, 8)
    s_in = 1.0 / jnp.sqrt(in_feat)       # PyTorch Conv2d default uniform bound
    s_int = 1.0 / jnp.sqrt(inter_feat)
    u = lambda k, shape, s: jax.random.uniform(k, shape, jnp.float32, -s, s)
    params = dict(
        wg=u(ks[0], (in_feat, inter_feat), s_in),
        bg=u(ks[1], (1, inter_feat), s_in),
        wth=u(ks[2], (in_feat, inter_feat), s_in),
        bth=u(ks[3], (1, inter_feat), s_in),
        wph=u(ks[4], (in_feat, inter_feat), s_in),
        bph=u(ks[5], (1, inter_feat), s_in),
        ww=u(ks[6], (inter_feat, in_feat), s_int),
        bw=u(ks[7], (1, in_feat), s_int),
        # BatchNorm2d of self.W folded into scale/shift (eval semantics):
        #   scale = gamma / sqrt(running_var + eps), shift = beta - mean*scale
        # The module's __init__ sets gamma = beta = 0  ->  scale = shift = 0.
        bn_scale=jnp.zeros((1, in_feat), jnp.float32),
        bn_shift=jnp.zeros((1, in_feat), jnp.float32),
    )
    return params


def nonlocal_ca_ref(x, params):
    """Pure-JAX f32 reference mirroring the PyTorch forward (eval-mode BN folded)."""
    B, C, H, W = x.shape
    H1, W1 = H // 2, W // 2

    def block(xq):                         # xq: (C, H1, W1)
        xf = xq.reshape(C, H1 * W1).T      # (N, C)
        g = xf @ params["wg"] + params["bg"]
        th = xf @ params["wth"] + params["bth"]
        ph = xf @ params["wph"] + params["bph"]
        attn = jax.nn.softmax(th @ ph.T, axis=-1)
        y = attn @ g
        wy = (y @ params["ww"] + params["bw"]) * params["bn_scale"] + params["bn_shift"]
        return (wy + xf).T.reshape(C, H1, W1)

    out = jnp.zeros_like(x)
    for b in range(B):
        out = out.at[b, :, :H1, :W1].set(block(x[b, :, :H1, :W1]))
        out = out.at[b, :, H1:, :W1].set(block(x[b, :, H1:, :W1]))
        out = out.at[b, :, :H1, W1:].set(block(x[b, :, :H1, W1:]))
        out = out.at[b, :, H1:, W1:].set(block(x[b, :, H1:, W1:]))
    return out


if __name__ == "__main__":
    key = jax.random.PRNGKey(0)
    kx, kp, kx2 = jax.random.split(key, 3)

    B, C, H, W = 2, 64, 16, 16            # in_feat=64, inter_feat=32 (module defaults)
    x = jax.random.normal(kx, (B, C, H, W), jnp.float32)
    params = init_params(kp, in_feat=C, inter_feat=32)

    # 1) Faithful init: BN gamma=beta=0 -> W-branch exactly zero -> output == input.
    out = nonlocal_ca_forward(x, params)
    jax.block_until_ready(out)
    ref = nonlocal_ca_ref(x, params)
    assert jnp.allclose(out, ref, atol=1e-5, rtol=1e-5), "mismatch (faithful init)"

    # 2) Full attention + W path with non-degenerate BN params.
    #    Looser tolerance: bf16 MXU operands (+ bf16 exp on v6e/v7x) and
    #    approximate reciprocal vs the f32 reference.
    params2 = dict(params)
    params2["bn_scale"] = jnp.full((1, C), 0.5, jnp.float32)
    params2["bn_shift"] = jnp.full((1, C), 0.1, jnp.float32)
    out2 = nonlocal_ca_forward(x, params2)
    jax.block_until_ready(out2)
    ref2 = nonlocal_ca_ref(x, params2)
    assert jnp.allclose(out2, ref2, atol=5e-2, rtol=5e-2), "mismatch (full path)"

    # 3) Larger batch exercises the Bb>1 (multi-batch-per-step) grid path.
    B3 = 8
    x3 = jax.random.normal(kx2, (B3, C, H, W), jnp.float32)
    out3 = nonlocal_ca_forward(x3, params2)
    jax.block_until_ready(out3)
    ref3 = nonlocal_ca_ref(x3, params2)
    assert jnp.allclose(out3, ref3, atol=5e-2, rtol=5e-2), "mismatch (batched path)"

    print("KERNEL_OK")
</pallas_src>

<mosaic_0001>
module attributes {stable_mosaic.version = 11 : i64} {
  func.func @_nonlocal_kernel(%arg0: i32, %arg1: memref<1x4x64x64xf32, #tpu.memory_space<vmem>>, %arg2: memref<64x384xbf16, #tpu.memory_space<vmem>>, %arg3: memref<1x384xf32, #tpu.memory_space<vmem>>, %arg4: memref<128x64xbf16, #tpu.memory_space<vmem>>, %arg5: memref<1x64xf32, #tpu.memory_space<vmem>>, %arg6: memref<1x4x64x64xf32, #tpu.memory_space<vmem>>) attributes {dimension_semantics = [#tpu.dimension_semantics<parallel>], iteration_bounds = array<i64: 2>, scalar_prefetch = 0 : i64, scratch_operands = 0 : i64, tpu.core_type = #tpu.core_type<tc>, window_params = [{transform_indices = @transform_0, window_bounds = array<i64: 1, 4, 64, 64>}, {pipeline_mode = #tpu.pipeline_mode<synchronous>, transform_indices = @transform_1, window_bounds = array<i64: 64, 384>}, {pipeline_mode = #tpu.pipeline_mode<synchronous>, transform_indices = @transform_2, window_bounds = array<i64: 1, 384>}, {pipeline_mode = #tpu.pipeline_mode<synchronous>, transform_indices = @transform_3, window_bounds = array<i64: 128, 64>}, {pipeline_mode = #tpu.pipeline_mode<synchronous>, transform_indices = @transform_4, window_bounds = array<i64: 1, 64>}, {transform_indices = @transform_5, window_bounds = array<i64: 1, 4, 64, 64>}]} {
    %c0 = arith.constant 0 : index
    %c0_0 = arith.constant 0 : index
    %c0_1 = arith.constant 0 : index
    %c0_2 = arith.constant 0 : index
    %0 = vector.load %arg1[%c0, %c0_0, %c0_1, %c0_2] : memref<1x4x64x64xf32, #tpu.memory_space<vmem>>, vector<1x4x64x64xf32>
    %1 = vector.shape_cast %0 : vector<1x4x64x64xf32> to vector<256x64xf32>
    %2 = arith.truncf %1 : vector<256x64xf32> to vector<256x64xbf16>
    %c0_3 = arith.constant 0 : index
    %c0_4 = arith.constant 0 : index
    %3 = vector.load %arg2[%c0_3, %c0_4] : memref<64x384xbf16, #tpu.memory_space<vmem>>, vector<64x384xbf16>
    %cst = arith.constant dense<0.000000e+00> : vector<256x384xf32>
    %4 = tpu.matmul %2, %3, %cst {dimension_numbers = #tpu.dot_dimension_numbers<[1], [0], [0], [1], [0, 0, 1, 1], [], []>} : vector<256x64xbf16>, vector<64x384xbf16>, vector<256x384xf32> -> vector<256x384xf32>
    %c0_5 = arith.constant 0 : index
    %c0_6 = arith.constant 0 : index
    %5 = vector.load %arg3[%c0_5, %c0_6] : memref<1x384xf32, #tpu.memory_space<vmem>>, vector<1x384xf32>
    %6 = vector.broadcast %5 : vector<1x384xf32> to vector<256x384xf32>
    %7 = arith.addf %4, %6 : vector<256x384xf32>
    %8 = vector.shape_cast %7 : vector<256x384xf32> to vector<4x64x384xf32>
    %9 = vector.extract_strided_slice %8 {offsets = [0, 0, 0], sizes = [4, 64, 128], strides = [1, 1, 1]} : vector<4x64x384xf32> to vector<4x64x128xf32>
    %10 = arith.truncf %9 : vector<4x64x128xf32> to vector<4x64x128xbf16>
    %11 = vector.extract_strided_slice %8 {offsets = [0, 0, 128], sizes = [4, 64, 128], strides = [1, 1, 1]} : vector<4x64x384xf32> to vector<4x64x128xf32>
    %12 = arith.truncf %11 : vector<4x64x128xf32> to vector<4x64x128xbf16>
    %13 = vector.extract_strided_slice %8 {offsets = [0, 0, 256], sizes = [4, 64, 128], strides = [1, 1, 1]} : vector<4x64x384xf32> to vector<4x64x128xf32>
    %14 = arith.truncf %13 : vector<4x64x128xf32> to vector<4x64x128xbf16>
    "tpu.trace_start"() <{level = 10 : i32, message = "qnd,qmd->qnm"}> : () -> ()
    %cst_7 = arith.constant dense<0.000000e+00> : vector<4x64x64xf32>
    %15 = tpu.matmul %10, %12, %cst_7 {dimension_numbers = #tpu.dot_dimension_numbers<[2], [2], [1], [1], [0, 0, 0, 1, 1, 1], [0], [0]>} : vector<4x64x128xbf16>, vector<4x64x128xbf16>, vector<4x64x64xf32> -> vector<4x64x64xf32>
    "tpu.trace_stop"() : () -> ()
    %cst_8 = arith.constant dense<0xFF800000> : vector<4x64xf32>
    %16 = vector.multi_reduction <maximumf>, %15, %cst_8 [2] : vector<4x64x64xf32> to vector<4x64xf32>
    %17 = vector.shape_cast %16 : vector<4x64xf32> to vector<4x64x1xf32>
    %18 = vector.broadcast %17 : vector<4x64x1xf32> to vector<4x64x64xf32>
    %19 = arith.subf %15, %18 : vector<4x64x64xf32>
    %20 = arith.truncf %19 : vector<4x64x64xf32> to vector<4x64x64xbf16>
    %21 = math.exp %20 : vector<4x64x64xbf16>
    %22 = arith.extf %21 : vector<4x64x64xbf16> to vector<4x64x64xf32>
    %cst_9 = arith.constant dense<0.000000e+00> : vector<4x64xf32>
    %23 = vector.multi_reduction <add>, %22, %cst_9 [2] : vector<4x64x64xf32> to vector<4x64xf32>
    %24 = vector.shape_cast %23 : vector<4x64xf32> to vector<4x64x1xf32>
    "tpu.trace_start"() <{level = 10 : i32, message = "qnm,qmd->qnd"}> : () -> ()
    %cst_10 = arith.constant dense<0.000000e+00> : vector<4x64x128xf32>
    %25 = tpu.matmul %21, %14, %cst_10 {dimension_numbers = #tpu.dot_dimension_numbers<[2], [1], [1], [2], [0, 0, 0, 1, 1, 2], [0], [0]>} : vector<4x64x64xbf16>, vector<4x64x128xbf16>, vector<4x64x128xf32> -> vector<4x64x128xf32>
    "tpu.trace_stop"() : () -> ()
    %26 = tpu.reciprocal %24 {approx = true} : vector<4x64x1xf32> -> vector<4x64x1xf32>
    %27 = vector.broadcast %26 : vector<4x64x1xf32> to vector<4x64x128xf32>
    %28 = arith.mulf %25, %27 : vector<4x64x128xf32>
    %29 = vector.shape_cast %28 : vector<4x64x128xf32> to vector<256x128xf32>
    %30 = arith.truncf %29 : vector<256x128xf32> to vector<256x128xbf16>
    %c0_11 = arith.constant 0 : index
    %c0_12 = arith.constant 0 : index
    %31 = vector.load %arg4[%c0_11, %c0_12] : memref<128x64xbf16, #tpu.memory_space<vmem>>, vector<128x64xbf16>
    %cst_13 = arith.constant dense<0.000000e+00> : vector<256x64xf32>
    %32 = tpu.matmul %30, %31, %cst_13 {dimension_numbers = #tpu.dot_dimension_numbers<[1], [0], [0], [1], [0, 0, 1, 1], [], []>} : vector<256x128xbf16>, vector<128x64xbf16>, vector<256x64xf32> -> vector<256x64xf32>
    %c0_14 = arith.constant 0 : index
    %c0_15 = arith.constant 0 : index
    %33 = vector.load %arg5[%c0_14, %c0_15] : memref<1x64xf32, #tpu.memory_space<vmem>>, vector<1x64xf32>
    %34 = vector.broadcast %33 : vector<1x64xf32> to vector<256x64xf32>
    %35 = arith.addf %32, %34 : vector<256x64xf32>
    %36 = arith.addf %35, %1 : vector<256x64xf32>
    %37 = vector.shape_cast %36 : vector<256x64xf32> to vector<1x4x64x64xf32>
    %c0_16 = arith.constant 0 : index
    %c0_17 = arith.constant 0 : index
    %c0_18 = arith.constant 0 : index
    %c0_19 = arith.constant 0 : index
    %38 = vector.load %arg6[%c0_16, %c0_17, %c0_18, %c0_19] : memref<1x4x64x64xf32, #tpu.memory_space<vmem>>, vector<1x4x64x64xf32>
    tpu.vector_store %arg6[%c0_16, %c0_17, %c0_18, %c0_19], %37 {strides = array<i32>} : memref<1x4x64x64xf32, #tpu.memory_space<vmem>>, vector<1x4x64x64xf32>,
    return
  }
  func.func @transform_0(%arg0: i32) -> (i32, i32, i32, i32) {
    %c0_i32 = arith.constant 0 : i32
    %c0_i32_0 = arith.constant 0 : i32
    %c0_i32_1 = arith.constant 0 : i32
    %c0_i32_2 = arith.constant 0 : i32
    return %arg0, %c0_i32, %c0_i32_0, %c0_i32_1 : i32, i32, i32, i32
  }
  func.func @transform_1(%arg0: i32) -> (i32, i32) {
    %c0_i32 = arith.constant 0 : i32
    %c0_i32_0 = arith.constant 0 : i32
    %c0_i32_1 = arith.constant 0 : i32
    return %c0_i32, %c0_i32_0 : i32, i32
  }
  func.func @transform_2(%arg0: i32) -> (i32, i32) {
    %c0_i32 = arith.constant 0 : i32
    %c0_i32_0 = arith.constant 0 : i32
    %c0_i32_1 = arith.constant 0 : i32
    return %c0_i32, %c0_i32_0 : i32, i32
  }
  func.func @transform_3(%arg0: i32) -> (i32, i32) {
    %c0_i32 = arith.constant 0 : i32
    %c0_i32_0 = arith.constant 0 : i32
    %c0_i32_1 = arith.constant 0 : i32
    return %c0_i32, %c0_i32_0 : i32, i32
  }
  func.func @transform_4(%arg0: i32) -> (i32, i32) {
    %c0_i32 = arith.constant 0 : i32
    %c0_i32_0 = arith.constant 0 : i32
    %c0_i32_1 = arith.constant 0 : i32
    return %c0_i32, %c0_i32_0 : i32, i32
  }
  func.func @transform_5(%arg0: i32) -> (i32, i32, i32, i32) {
    %c0_i32 = arith.constant 0 : i32
    %c0_i32_0 = arith.constant 0 : i32
    %c0_i32_1 = arith.constant 0 : i32
    %c0_i32_2 = arith.constant 0 : i32
    return %arg0, %c0_i32, %c0_i32_0, %c0_i32_1 : i32, i32, i32, i32
  }
}

</mosaic_0001>

<llo_original>
// kernel: _nonlocal_ca_forward.1
$region0: #{_nonlocal_ca_forward.1}
  #allocation0 [shape = 'u32[]', space=smem, size = 0x4, offset = 0x4, fixed_abs, tag = 'smem constant byte address 0x4 - core index']
  #allocation1 [shape = 'u32[144,128]{1,0:T(1,128)}', space=vmem, size = 0x12000, scoped, tag = 'internal scratch']
  %s0 = inlined_call_operand.vmem [shape: f32[2,4,64,64], index: 0, kind: input, shape index: {}]
  %s1 = inlined_call_operand.vmem [shape: bf16[64,384], index: 1, kind: input, shape index: {}]
  %s2 = inlined_call_operand.vmem [shape: f32[1,384], index: 2, kind: input, shape index: {}]
  %s3 = inlined_call_operand.vmem [shape: bf16[128,64], index: 3, kind: input, shape index: {}]
  %s4 = inlined_call_operand.vmem [shape: f32[1,64], index: 4, kind: input, shape index: {}]
  %s5 = inlined_call_operand.vmem [shape: f32[2,4,64,64], index: 5, kind: output, shape index: {}]
  %s6 = sld [smem:[#allocation0]]
  $region53: #{_nonlocal_ca_forward.1} parent=0
    _
  %s8 = ssub.s32 1, %s6
  %s9 = scalar_select 0, %s8, %s6
  loop: start=0, step=1, limit=4
  $region2: #{_nonlocal_ca_forward.1} parent=0 // loop_pre_header
    _
  $region3: #{_nonlocal_ca_forward.1} parent=0 // loop_header
    %s11 = sphi 0, %s15
    %p12 = scmp.ge.s32.totalorder %s11, 4
    %s21 = sphi 0, %s23
    %s24 = sphi 0, %s21
    %s25 = sphi 0, %s24
    %s41 = sphi 0, %s25
    %s45 = sphi 0, %s45
    %s47 = sphi 0, %s45
    %s48 = sphi 0, %s47
    %s62 = sphi 0, %s48
    %s66 = sphi 0, %s66
    %s68 = sphi 0, %s66
    %s69 = sphi 0, %s68
    %s83 = sphi 0, %s69
    %s87 = sphi 0, %s87
    %s89 = sphi 0, %s87
    %s90 = sphi 0, %s89
    %s104 = sphi 0, %s90
    %s108 = sphi 0, %s108
    %s110 = sphi 0, %s108
    %s111 = sphi 0, %s110
    %s125 = sphi 0, %s111
    %s131 = sphi 0, %s133
    %s134 = sphi 0, %s131
    %s135 = sphi 0, %s134
    %s151 = sphi 0, %s135
  $region4: #{_nonlocal_ca_forward.1} parent=0 // loop_header_branch
    %14 = sbr.rel (%p12) target = $region8
  $region5: #{_nonlocal_ca_forward.1} parent=0 // loop_body
    %s16 = ssub.s32 %s11, 1
    %s17 = ssub.s32 %s11, 2
    %s18 = sadd.s32 %s11, 1
    %s19 = ssub.s32 %s11, %s18
    %p20 = scmp.eq.s32.totalorder %s19, 0
    %s22 = sadd.s32 %s21, 1
    %s23 = scalar_select %p20, %s21, %s22
    %p26 = pneg %p20
    %p27 = scmp.eq.s32.totalorder %s11, 1
    %p28 = por %p26, %p27
    %p29 = scmp.ne.s32.totalorder %s21, %s24
    %p30 = scmp.eq.s32.totalorder %s11, 0
    %p31 = por %p29, %p30
    %p32 = scmp.ne.s32.totalorder %s21, %s24
    %p33 = scmp.eq.s32.totalorder %s16, 1
    %p34 = por %p32, %p33
    %p35 = scmp.ne.s32.totalorder %s24, %s25
    %p36 = scmp.eq.s32.totalorder %s16, 0
    %p37 = por %p35, %p36
    %p38 = scmp.ne.s32.totalorder %s24, %s25
    %p39 = scmp.eq.s32.totalorder %s17, 1
    %p40 = por %p38, %p39
    %p42 = scmp.ne.s32.totalorder %s25, %s41
    %p43 = scmp.eq.s32.totalorder %s17, 0
    %p44 = por %p42, %p43
    %s46 = sadd.s32 %s45, 1
    %p49 = scmp.eq.s32.totalorder %s11, 1
    %p50 = scmp.ne.s32.totalorder %s45, %s47
    %p51 = scmp.eq.s32.totalorder %s11, 0
    %p52 = por %p50, %p51
    %p53 = scmp.ne.s32.totalorder %s45, %s47
    %p54 = scmp.eq.s32.totalorder %s16, 1
    %p55 = por %p53, %p54
    %p56 = scmp.ne.s32.totalorder %s47, %s48
    %p57 = scmp.eq.s32.totalorder %s16, 0
    %p58 = por %p56, %p57
    %p59 = scmp.ne.s32.totalorder %s47, %s48
    %p60 = scmp.eq.s32.totalorder %s17, 1
    %p61 = por %p59, %p60
    %p63 = scmp.ne.s32.totalorder %s48, %s62
    %p64 = scmp.eq.s32.totalorder %s17, 0
    %p65 = por %p63, %p64
    %s67 = sadd.s32 %s66, 1
    %p70 = scmp.eq.s32.totalorder %s11, 1
    %p71 = scmp.ne.s32.totalorder %s66, %s68
    %p72 = scmp.eq.s32.totalorder %s11, 0
    %p73 = por %p71, %p72
    %p74 = scmp.ne.s32.totalorder %s66, %s68
    %p75 = scmp.eq.s32.totalorder %s16, 1
    %p76 = por %p74, %p75
    %p77 = scmp.ne.s32.totalorder %s68, %s69
    %p78 = scmp.eq.s32.totalorder %s16, 0
    %p79 = por %p77, %p78
    %p80 = scmp.ne.s32.totalorder %s68, %s69
    %p81 = scmp.eq.s32.totalorder %s17, 1
    %p82 = por %p80, %p81
    %p84 = scmp.ne.s32.totalorder %s69, %s83
    %p85 = scmp.eq.s32.totalorder %s17, 0
    %p86 = por %p84, %p85
    %s88 = sadd.s32 %s87, 1
    %p91 = scmp.eq.s32.totalorder %s11, 1
    %p92 = scmp.ne.s32.totalorder %s87, %s89
    %p93 = scmp.eq.s32.totalorder %s11, 0
    %p94 = por %p92, %p93
    %p95 = scmp.ne.s32.totalorder %s87, %s89
    %p96 = scmp.eq.s32.totalorder %s16, 1
    %p97 = por %p95, %p96
    %p98 = scmp.ne.s32.totalorder %s89, %s90
    %p99 = scmp.eq.s32.totalorder %s16, 0
    %p100 = por %p98, %p99
    %p101 = scmp.ne.s32.totalorder %s89, %s90
    %p102 = scmp.eq.s32.totalorder %s17, 1
    %p103 = por %p101, %p102
    %p105 = scmp.ne.s32.totalorder %s90, %s104
    %p106 = scmp.eq.s32.totalorder %s17, 0
    %p107 = por %p105, %p106
    %s109 = sadd.s32 %s108, 1
    %p112 = scmp.eq.s32.totalorder %s11, 1
    %p113 = scmp.ne.s32.totalorder %s108, %s110
    %p114 = scmp.eq.s32.totalorder %s11, 0
    %p115 = por %p113, %p114
    %p116 = scmp.ne.s32.totalorder %s108, %s110
    %p117 = scmp.eq.s32.totalorder %s16, 1
    %p118 = por %p116, %p117
    %p119 = scmp.ne.s32.totalorder %s110, %s111
    %p120 = scmp.eq.s32.totalorder %s16, 0
    %p121 = por %p119, %p120
    %p122 = scmp.ne.s32.totalorder %s110, %s111
    %p123 = scmp.eq.s32.totalorder %s17, 1
    %p124 = por %p122, %p123
    %p126 = scmp.ne.s32.totalorder %s111, %s125
    %p127 = scmp.eq.s32.totalorder %s17, 0
    %p128 = por %p126, %p127
    %s129 = ssub.s32 %s11, %s18
    %p130 = scmp.eq.s32.totalorder %s129, 0
    %s132 = sadd.s32 %s131, 1
    %s133 = scalar_select %p130, %s131, %s132
    %p136 = pneg %p130
    %p137 = scmp.eq.s32.totalorder %s11, 1
    %p138 = por %p136, %p137
    %p139 = scmp.ne.s32.totalorder %s131, %s134
    %p140 = scmp.eq.s32.totalorder %s11, 0
    %p141 = por %p139, %p140
    %p142 = scmp.ne.s32.totalorder %s131, %s134
    %p143 = scmp.eq.s32.totalorder %s16, 1
    %p144 = por %p142, %p143
    %p145 = scmp.ne.s32.totalorder %s134, %s135
    %p146 = scmp.eq.s32.totalorder %s16, 0
    %p147 = por %p145, %p146
    %p148 = scmp.ne.s32.totalorder %s134, %s135
    %p149 = scmp.eq.s32.totalorder %s17, 1
    %p150 = por %p148, %p149
    %p152 = scmp.ne.s32.totalorder %s135, %s151
    %p153 = scmp.eq.s32.totalorder %s17, 0
    %p154 = por %p152, %p153
    %p155 = scmp.le.s32.totalorder 1, %s11
    %p156 = scmp.lt.s32.totalorder %s11, 3
    %p157 = pnand %p155, %p156
    %p158 = pneg %p157
    // Predicated region
    $region9: #{_nonlocal_ca_forward.1} parent=5 // pred_check
      _
    $region10: #{_nonlocal_ca_forward.1} parent=5 // pred_check_branch
      %160 = sbr.rel (%p157) target = $region12
    $region11: #{_nonlocal_ca_forward.1} parent=5 // pred_region
      %s161 = ssub.s32 %s11, 1
      // Predicated region
      $region13: #{_nonlocal_ca_forward.1} parent=11 // pred_check
        %p162 = pneg %p58
      $region14: #{_nonlocal_ca_forward.1} parent=11 // pred_check_branch
        %164 = sbr.rel (%p162) target = $region16
      $region15: #{_nonlocal_ca_forward.1} parent=11 // pred_region
        _
      $region16: #{_nonlocal_ca_forward.1} parent=11 // pred_fallthru
        _
      // Predicated region
      $region17: #{_nonlocal_ca_forward.1} parent=11 // pred_check
        %p165 = pneg %p79
      $region18: #{_nonlocal_ca_forward.1} parent=11 // pred_check_branch
        %167 = sbr.rel (%p165) target = $region20
      $region19: #{_nonlocal_ca_forward.1} parent=11 // pred_region
        _
      $region20: #{_nonlocal_ca_forward.1} parent=11 // pred_fallthru
        _
      // Predicated region
      $region21: #{_nonlocal_ca_forward.1} parent=11 // pred_check
        %p168 = pneg %p100
      $region22: #{_nonlocal_ca_forward.1} parent=11 // pred_check_branch
        %170 = sbr.rel (%p168) target = $region24
      $region23: #{_nonlocal_ca_forward.1} parent=11 // pred_region
        _
      $region24: #{_nonlocal_ca_forward.1} parent=11 // pred_fallthru
        _
      // Predicated region
      $region25: #{_nonlocal_ca_forward.1} parent=11 // pred_check
        %p171 = pneg %p121
      $region26: #{_nonlocal_ca_forward.1} parent=11 // pred_check_branch
        %173 = sbr.rel (%p171) target = $region28
      $region27: #{_nonlocal_ca_forward.1} parent=11 // pred_region
        _
      $region28: #{_nonlocal_ca_forward.1} parent=11 // pred_fallthru
        _
    $region12: #{_nonlocal_ca_forward.1} parent=5 // pred_fallthru
      _
    %p174 = scmp.lt.s32.totalorder %s11, 2
    // Predicated region
    $region29: #{_nonlocal_ca_forward.1} parent=5 // pred_check
      %p175 = pneg %p174
    $region30: #{_nonlocal_ca_forward.1} parent=5 // pred_check_branch
      %177 = sbr.rel (%p175) target = $region32
    $region31: #{_nonlocal_ca_forward.1} parent=5 // pred_region
      // Predicated region
      $region33: #{_nonlocal_ca_forward.1} parent=31 // pred_check
        %p178 = pneg %p31
      $region34: #{_nonlocal_ca_forward.1} parent=31 // pred_check_branch
        %180 = sbr.rel (%p178) target = $region36
      $region35: #{_nonlocal_ca_forward.1} parent=31 // pred_region
        %p181 = scmp.lt.s32.totalorder %s11, 1
        %s182 = scalar_select %p181, %s11, 1
        %s183 = smul.addr %s182, 32
        %s184 = smul.addr %s183, 8
        %s185 = scalar_lea.vmem %s0, %s184
      $region36: #{_nonlocal_ca_forward.1} parent=31 // pred_fallthru
        _
    $region32: #{_nonlocal_ca_forward.1} parent=5 // pred_fallthru
      _
    %p186 = scmp.le.s32.totalorder 1, %s11
    %p187 = scmp.lt.s32.totalorder %s11, 3
    %p188 = pnand %p186, %p187
    %p189 = pneg %p188
    // Predicated region
    $region37: #{_nonlocal_ca_forward.1} parent=5 // pred_check
      _
    $region38: #{_nonlocal_ca_forward.1} parent=5 // pred_check_branch
      %191 = sbr.rel (%p188) target = $region40
    $region39: #{_nonlocal_ca_forward.1} parent=5 // pred_region
      %s192 = ssub.s32 %s11, 1
      %p193 = scmp.lt.s32.totalorder %s16, 1
      %s194 = scalar_select %p193, %s16, 1
      %s195 = smul.addr %s194, 32
      %s196 = smul.addr %s195, 8
      %s197 = scalar_lea.vmem %s0, %s196
      %p198 = pneg %p37
      %p199 = pneg %p34
      %p200 = pneg %p58
      %p201 = pneg %p55
      %p202 = pneg %p79
      %p203 = pneg %p76
      %p204 = pneg %p100
      %p205 = pneg %p97
      %p206 = pneg %p121
      %p207 = pneg %p118
      %p208 = pneg %p147
      %p209 = pneg %p144
      %p210 = scmp.lt.s32.totalorder %s16, 1
      %s211 = scalar_select %p210, %s16, 1
      %s212 = smul.addr %s211, 32
      %s213 = smul.addr %s212, 8
      %s214 = scalar_lea.vmem %s5, %s213
      %p215 = scmp.lt.s32.totalorder %s16, 1
      %s216 = scalar_select %p215, %s16, 1
      %s217 = smul.addr %s216, 32
      %s218 = smul.addr %s217, 8
      %s219 = scalar_lea.vmem %s0, %s218
      %p220 = scmp.lt.s32.totalorder %s16, 1
      %s221 = scalar_select %p220, %s16, 1
      %s222 = smul.addr %s221, 32
      %s223 = smul.addr %s222, 8
      %s224 = scalar_lea.vmem %s5, %s223
      %v226 = vld [vmem:[%s219] sm:$0xff]
      %v227 = vld [vmem:[%s219 + $0x8] sm:$0xff]
      %v228 = vld [vmem:[%s219 + $0x10] sm:$0xff]
      %v229 = vld [vmem:[%s219 + $0x18] sm:$0xff]
      %v230 = vld [vmem:[%s219 + $0x20] sm:$0xff]
      %v231 = vld [vmem:[%s219 + $0x28] sm:$0xff]
      %v232 = vld [vmem:[%s219 + $0x30] sm:$0xff]
      %v233 = vld [vmem:[%s219 + $0x38] sm:$0xff]
      %v234 = vld [vmem:[%s219 + $0x40] sm:$0xff]
      %v235 = vld [vmem:[%s219 + $0x48] sm:$0xff]
      %v236 = vld [vmem:[%s219 + $0x50] sm:$0xff]
      %v237 = vld [vmem:[%s219 + $0x58] sm:$0xff]
      %v238 = vld [vmem:[%s219 + $0x60] sm:$0xff]
      %v239 = vld [vmem:[%s219 + $0x68] sm:$0xff]
      %v240 = vld [vmem:[%s219 + $0x70] sm:$0xff]
      %v241 = vld [vmem:[%s219 + $0x78] sm:$0xff]
      %v242 = vld [vmem:[%s219 + $0x80] sm:$0xff]
      %v243 = vld [vmem:[%s219 + $0x88] sm:$0xff]
      %v244 = vld [vmem:[%s219 + $0x90] sm:$0xff]
      %v245 = vld [vmem:[%s219 + $0x98] sm:$0xff]
      %v246 = vld [vmem:[%s219 + $0xa0] sm:$0xff]
      %v247 = vld [vmem:[%s219 + $0xa8] sm:$0xff]
      %v248 = vld [vmem:[%s219 + $0xb0] sm:$0xff]
      %v249 = vld [vmem:[%s219 + $0xb8] sm:$0xff]
      %v250 = vld [vmem:[%s219 + $0xc0] sm:$0xff]
      %v251 = vld [vmem:[%s219 + $0xc8] sm:$0xff]
      %v252 = vld [vmem:[%s219 + $0xd0] sm:$0xff]
      %v253 = vld [vmem:[%s219 + $0xd8] sm:$0xff]
      %v254 = vld [vmem:[%s219 + $0xe0] sm:$0xff]
      %v255 = vld [vmem:[%s219 + $0xe8] sm:$0xff]
      %v256 = vld [vmem:[%s219 + $0xf0] sm:$0xff]
      %v257 = vld [vmem:[%s219 + $0xf8] sm:$0xff]
      %v258 = vpack.c.bf16 %v227, %v226
      %v259 = vpack.c.bf16 %v229, %v228
      %v260 = vpack.c.bf16 %v231, %v230
      %v261 = vpack.c.bf16 %v233, %v232
      %v262 = vpack.c.bf16 %v235, %v234
      %v263 = vpack.c.bf16 %v237, %v236
      %v264 = vpack.c.bf16 %v239, %v238
      %v265 = vpack.c.bf16 %v241, %v240
      %v266 = vpack.c.bf16 %v243, %v242
      %v267 = vpack.c.bf16 %v245, %v244
      %v268 = vpack.c.bf16 %v247, %v246
      %v269 = vpack.c.bf16 %v249, %v248
      %v270 = vpack.c.bf16 %v251, %v250
      %v271 = vpack.c.bf16 %v253, %v252
      %v272 = vpack.c.bf16 %v255, %v254
      %v273 = vpack.c.bf16 %v257, %v256
      %v274 = vld [vmem:[%s1] sm:$0xff]
      %v275 = vld [vmem:[%s1 + $0x8] sm:$0xf]
      %v276 = vld [vmem:[%s1 + $0xc] sm:$0xff]
      %v277 = vld [vmem:[%s1 + $0x14] sm:$0xf]
      %v278 = vld [vmem:[%s1 + $0x18] sm:$0xff]
      %v279 = vld [vmem:[%s1 + $0x20] sm:$0xf]
      %v280 = vld [vmem:[%s1 + $0x24] sm:$0xff]
      %v281 = vld [vmem:[%s1 + $0x2c] sm:$0xf]
      %v282 = vld [vmem:[%s1 + $0x30] sm:$0xff]
      %v283 = vld [vmem:[%s1 + $0x38] sm:$0xf]
      %v284 = vld [vmem:[%s1 + $0x3c] sm:$0xff]
      %v285 = vld [vmem:[%s1 + $0x44] sm:$0xf]
      %v286 = vld [vmem:[%s1 + $0x48] sm:$0xff]
      %v287 = vld [vmem:[%s1 + $0x50] sm:$0xf]
      %v288 = vld [vmem:[%s1 + $0x54] sm:$0xff]
      %v289 = vld [vmem:[%s1 + $0x5c] sm:$0xf]
      %v290 = vld [vmem:[%s2] sm:$0x7]
      %v292 = vlaneseq
      %v293 = vshrl.u32 %v292, 7
      %v294 = vsub.s32 0, %v293
      %v295 = vrot.slane %v290, %v294
      %v296 = vlaneseq
      %v297 = vshrl.u32 %v296, 7
      %v298 = vsub.s32 1, %v297
      %v299 = vrot.slane %v290, %v298
      %v300 = vlaneseq
      %v301 = vshrl.u32 %v300, 7
      %v302 = vsub.s32 2, %v301
      %v303 = vrot.slane %v290, %v302
      %v323 = vunpack.c.l.b16 %v274
      %v324 = vunpack.c.h.b16 %v274
      %v325 = vunpack.c.l.b16 %v275
      %v326 = vunpack.c.l.b16 %v276
      %v327 = vunpack.c.h.b16 %v276
      %v328 = vunpack.c.l.b16 %v277
      %v329 = vunpack.c.l.b16 %v278
      %v330 = vunpack.c.h.b16 %v278
      %v331 = vunpack.c.l.b16 %v279
      %v332 = vunpack.c.l.b16 %v280
      %v333 = vunpack.c.h.b16 %v280
      %v334 = vunpack.c.l.b16 %v281
      %v335 = vunpack.c.l.b16 %v282
      %v336 = vunpack.c.h.b16 %v282
      %v337 = vunpack.c.l.b16 %v283
      %v338 = vunpack.c.l.b16 %v284
      %v339 = vunpack.c.h.b16 %v284
      %v340 = vunpack.c.l.b16 %v285
      %v341 = vunpack.c.l.b16 %v286
      %v342 = vunpack.c.h.b16 %v286
      %v343 = vunpack.c.l.b16 %v287
      %v344 = vunpack.c.l.b16 %v288
      %v345 = vunpack.c.h.b16 %v288
      %v346 = vunpack.c.l.b16 %v289
      %v347 = vpack.c.b16 %v326, %v323
      %v348 = vpack.c.b16 %v327, %v324
      %v349 = vpack.c.b16 %v328, %v325
      %v350 = vpack.c.b16 %v332, %v329
      %v351 = vpack.c.b16 %v333, %v330
      %v352 = vpack.c.b16 %v334, %v331
      %v353 = vpack.c.b16 %v338, %v335
      %v354 = vpack.c.b16 %v339, %v336
      %v355 = vpack.c.b16 %v340, %v337
      %v356 = vpack.c.b16 %v344, %v341
      %v357 = vpack.c.b16 %v345, %v342
      %v358 = vpack.c.b16 %v346, %v343
      %vm371 = vcmask 523264
      %v373 = vsel %vm371, %v258, 0
      %v376 = vsel %vm371, %v259, 0
      %v379 = vsel %vm371, %v260, 0
      %v382 = vsel %vm371, %v261, 0
      %v385 = vsel %vm371, %v262, 0
      %v388 = vsel %vm371, %v263, 0
      %v391 = vsel %vm371, %v264, 0
      %v394 = vsel %vm371, %v265, 0
      %v397 = vsel %vm371, %v266, 0
      %v400 = vsel %vm371, %v267, 0
      %v403 = vsel %vm371, %v268, 0
      %v406 = vsel %vm371, %v269, 0
      %v409 = vsel %vm371, %v270, 0
      %v412 = vsel %vm371, %v271, 0
      %v415 = vsel %vm371, %v272, 0
      %v418 = vsel %vm371, %v273, 0
      %420 = vmatprep.subr.bf16.mxu0 %v348
      %421 = vmatpush1.bf16.msra.mxu0 %v347
      %422 = vmatprep.subr.bf16.mxu0 %v351
      %423 = vmatpush1.bf16.msra.mxu0 %v350
      %424 = vmatprep.subr.bf16.mxu0 %v354
      %425 = vmatpush1.bf16.msra.mxu0 %v353
      %426 = vmatprep.subr.bf16.mxu0 %v357
      %427 = vmatpush1.bf16.msra.mxu0 %v356
      %428 = vmatprep.subr.bf16.mxu0 0
      %429 = vmatpush1.bf16.msra.mxu0 0
      %430 = vmatprep.subr.bf16.mxu0 0
      %431 = vmatpush1.bf16.msra.mxu0 0
      %432 = vmatprep.subr.bf16.mxu0 0
      %433 = vmatpush1.bf16.msra.mxu0 0
      %434 = vmatprep.subr.bf16.mxu0 0
      %435 = vmatpush1.bf16.msra.mxu0 0
      %436 = vmatprep.subr.bf16.mxu0 0
      %437 = vmatpush1.bf16.msra.mxu0 0
      %438 = vmatprep.subr.bf16.mxu0 0
      %439 = vmatpush1.bf16.msra.mxu0 0
      %440 = vmatprep.subr.bf16.mxu0 0
      %441 = vmatpush1.bf16.msra.mxu0 0
      %442 = vmatprep.subr.bf16.mxu0 0
      %443 = vmatpush1.bf16.msra.mxu0 0
      %444 = vmatprep.subr.bf16.mxu0 0
      %445 = vmatpush1.bf16.msra.mxu0 0
      %446 = vmatprep.subr.bf16.mxu0 0
      %447 = vmatpush1.bf16.msra.mxu0 0
      %448 = vmatprep.subr.bf16.mxu0 0
      %449 = vmatpush1.bf16.msra.mxu0 0
      %450 = vmatprep.subr.bf16.mxu0 0
      %451 = vmatpush1.bf16.msra.mxu0 0
      %452 = vmatprep.mubr.bf16.mxu0 0
      %453 = vmatmul.mubr.bf16.gmra.mrb[0].mxu0 %v373
      %v454 = vpop.f32.mrb[0].mxu0
      %v455 = vadd.f32 %v295, %v454
      %v456 = vpop.f32.mrb[0].mxu0
      %v457 = vadd.f32 %v299, %v456
      %v458 = vpop.f32.mrb[0].mxu0
      %v459 = vadd.f32 %v295, %v458
      %v460 = vpop.f32.mrb[0].mxu0
      %v461 = vadd.f32 %v299, %v460
      %462 = vmatprep.mubr.bf16.mxu0 0
      %463 = vmatmul.mubr.bf16.gmra.mrb[0].mxu0 %v376
      %v464 = vpop.f32.mrb[0].mxu0
      %v465 = vadd.f32 %v295, %v464
      %v466 = vpop.f32.mrb[0].mxu0
      %v467 = vadd.f32 %v299, %v466
      %v468 = vpop.f32.mrb[0].mxu0
      %v469 = vadd.f32 %v295, %v468
      %v470 = vpop.f32.mrb[0].mxu0
      %v471 = vadd.f32 %v299, %v470
      %472 = vmatprep.mubr.bf16.mxu0 0
      %473 = vmatmul.mubr.bf16.gmra.mrb[0].mxu0 %v379
      %v474 = vpop.f32.mrb[0].mxu0
      %v475 = vadd.f32 %v295, %v474
      %v476 = vpop.f32.mrb[0].mxu0
      %v477 = vadd.f32 %v299, %v476
      %v478 = vpop.f32.mrb[0].mxu0
      %v479 = vadd.f32 %v295, %v478
      %v480 = vpop.f32.mrb[0].mxu0
      %v481 = vadd.f32 %v299, %v480
      %482 = vmatprep.mubr.bf16.mxu0 0
      %483 = vmatmul.mubr.bf16.gmra.mrb[0].mxu0 %v382
      %v484 = vpop.f32.mrb[0].mxu0
      %v485 = vadd.f32 %v295, %v484
      %v486 = vpop.f32.mrb[0].mxu0
      %v487 = vadd.f32 %v299, %v486
      %v488 = vpop.f32.mrb[0].mxu0
      %v489 = vadd.f32 %v295, %v488
      %v490 = vpop.f32.mrb[0].mxu0
      %v491 = vadd.f32 %v299, %v490
      %492 = vmatprep.mubr.bf16.mxu0 0
      %493 = vmatmul.mubr.bf16.gmra.mrb[0].mxu0 %v385
      %v494 = vpop.f32.mrb[0].mxu0
      %v495 = vadd.f32 %v295, %v494
      %v496 = vpop.f32.mrb[0].mxu0
      %v497 = vadd.f32 %v299, %v496
      %v498 = vpop.f32.mrb[0].mxu0
      %v499 = vadd.f32 %v295, %v498
      %v500 = vpop.f32.mrb[0].mxu0
      %v501 = vadd.f32 %v299, %v500
      %502 = vmatprep.mubr.bf16.mxu0 0
      %503 = vmatmul.mubr.bf16.gmra.mrb[0].mxu0 %v388
      %v504 = vpop.f32.mrb[0].mxu0
      %v505 = vadd.f32 %v295, %v504
      %v506 = vpop.f32.mrb[0].mxu0
      %v507 = vadd.f32 %v299, %v506
      %v508 = vpop.f32.mrb[0].mxu0
      %v509 = vadd.f32 %v295, %v508
      %v510 = vpop.f32.mrb[0].mxu0
      %v511 = vadd.f32 %v299, %v510
      %512 = vmatprep.mubr.bf16.mxu0 0
      %513 = vmatmul.mubr.bf16.gmra.mrb[0].mxu0 %v391
      %v514 = vpop.f32.mrb[0].mxu0
      %v515 = vadd.f32 %v295, %v514
      %v516 = vpop.f32.mrb[0].mxu0
      %v517 = vadd.f32 %v299, %v516
      %v518 = vpop.f32.mrb[0].mxu0
      %v519 = vadd.f32 %v295, %v518
      %v520 = vpop.f32.mrb[0].mxu0
      %v521 = vadd.f32 %v299, %v520
      %522 = vmatprep.mubr.bf16.mxu0 0
      %523 = vmatmul.mubr.bf16.gmra.mrb[0].mxu0 %v394
      %v524 = vpop.f32.mrb[0].mxu0
      %v525 = vadd.f32 %v295, %v524
      %v526 = vpop.f32.mrb[0].mxu0
      %v527 = vadd.f32 %v299, %v526
      %v528 = vpop.f32.mrb[0].mxu0
      %v529 = vadd.f32 %v295, %v528
      %v530 = vpop.f32.mrb[0].mxu0
      %v531 = vadd.f32 %v299, %v530
      %532 = vmatprep.mubr.bf16.mxu0 0
      %533 = vmatmul.mubr.bf16.gmra.mrb[0].mxu0 %v397
      %v534 = vpop.f32.mrb[0].mxu0
      %v535 = vadd.f32 %v295, %v534
      %v536 = vpop.f32.mrb[0].mxu0
      %v537 = vadd.f32 %v299, %v536
      %v538 = vpop.f32.mrb[0].mxu0
      %v539 = vadd.f32 %v295, %v538
      %v540 = vpop.f32.mrb[0].mxu0
      %v541 = vadd.f32 %v299, %v540
      %542 = vmatprep.mubr.bf16.mxu0 0
      %543 = vmatmul.mubr.bf16.gmra.mrb[0].mxu0 %v400
      %v544 = vpop.f32.mrb[0].mxu0
      %v545 = vadd.f32 %v295, %v544
      %v546 = vpop.f32.mrb[0].mxu0
      %v547 = vadd.f32 %v299, %v546
      %v548 = vpop.f32.mrb[0].mxu0
      %v549 = vadd.f32 %v295, %v548
      %v550 = vpop.f32.mrb[0].mxu0
      %v551 = vadd.f32 %v299, %v550
      %552 = vmatprep.mubr.bf16.mxu0 0
      %553 = vmatmul.mubr.bf16.gmra.mrb[0].mxu0 %v403
      %v554 = vpop.f32.mrb[0].mxu0
      %v555 = vadd.f32 %v295, %v554
      %v556 = vpop.f32.mrb[0].mxu0
      %v557 = vadd.f32 %v299, %v556
      %v558 = vpop.f32.mrb[0].mxu0
      %v559 = vadd.f32 %v295, %v558
      %v560 = vpop.f32.mrb[0].mxu0
      %v561 = vadd.f32 %v299, %v560
      %562 = vmatprep.mubr.bf16.mxu0 0
      %563 = vmatmul.mubr.bf16.gmra.mrb[0].mxu0 %v406
      %v564 = vpop.f32.mrb[0].mxu0
      %v565 = vadd.f32 %v295, %v564
      %v566 = vpop.f32.mrb[0].mxu0
      %v567 = vadd.f32 %v299, %v566
      %v568 = vpop.f32.mrb[0].mxu0
      %v569 = vadd.f32 %v295, %v568
      %v570 = vpop.f32.mrb[0].mxu0
      %v571 = vadd.f32 %v299, %v570
      %572 = vmatprep.mubr.bf16.mxu0 0
      %573 = vmatmul.mubr.bf16.gmra.mrb[0].mxu0 %v409
      %v574 = vpop.f32.mrb[0].mxu0
      %v575 = vadd.f32 %v295, %v574
      %v576 = vpop.f32.mrb[0].mxu0
      %v577 = vadd.f32 %v299, %v576
      %v578 = vpop.f32.mrb[0].mxu0
      %v579 = vadd.f32 %v295, %v578
      %v580 = vpop.f32.mrb[0].mxu0
      %v581 = vadd.f32 %v299, %v580
      %582 = vmatprep.mubr.bf16.mxu0 0
      %583 = vmatmul.mubr.bf16.gmra.mrb[0].mxu0 %v412
      %v584 = vpop.f32.mrb[0].mxu0
      %v585 = vadd.f32 %v295, %v584
      %v586 = vpop.f32.mrb[0].mxu0
      %v587 = vadd.f32 %v299, %v586
      %v588 = vpop.f32.mrb[0].mxu0
      %v589 = vadd.f32 %v295, %v588
      %v590 = vpop.f32.mrb[0].mxu0
      %v591 = vadd.f32 %v299, %v590
      %592 = vmatprep.mubr.bf16.mxu0 0
      %593 = vmatmul.mubr.bf16.gmra.mrb[0].mxu0 %v415
      %v594 = vpop.f32.mrb[0].mxu0
      %v595 = vadd.f32 %v295, %v594
      %v596 = vpop.f32.mrb[0].mxu0
      %v597 = vadd.f32 %v299, %v596
      %v598 = vpop.f32.mrb[0].mxu0
      %v599 = vadd.f32 %v295, %v598
      %v600 = vpop.f32.mrb[0].mxu0
      %v601 = vadd.f32 %v299, %v600
      %602 = vmatprep.mubr.bf16.mxu0 0
      %603 = vmatmul.mubr.bf16.gmra.mrb[0].mxu0 %v418
      %v604 = vpop.f32.mrb[0].mxu0
      %v605 = vadd.f32 %v295, %v604
      %v606 = vpop.f32.mrb[0].mxu0
      %v607 = vadd.f32 %v299, %v606
      %v608 = vpop.f32.mrb[0].mxu0
      %v609 = vadd.f32 %v295, %v608
      %v610 = vpop.f32.mrb[0].mxu0
      %v611 = vadd.f32 %v299, %v610
      %612 = vdwg.mxu0
      %613 = vmatprep.subr.bf16.mxu0 0
      %614 = vmatpush1.bf16.msra.mxu0 %v349
      %615 = vmatprep.subr.bf16.mxu0 0
      %616 = vmatpush1.bf16.msra.mxu0 %v352
      %617 = vmatprep.subr.bf16.mxu0 0
      %618 = vmatpush1.bf16.msra.mxu0 %v355
      %619 = vmatprep.subr.bf16.mxu0 0
      %620 = vmatpush1.bf16.msra.mxu0 %v358
      %621 = vmatprep.subr.bf16.mxu0 0
      %622 = vmatpush1.bf16.msra.mxu0 0
      %623 = vmatprep.subr.bf16.mxu0 0
      %624 = vmatpush1.bf16.msra.mxu0 0
      %625 = vmatprep.subr.bf16.mxu0 0
      %626 = vmatpush1.bf16.msra.mxu0 0
      %627 = vmatprep.subr.bf16.mxu0 0
      %628 = vmatpush1.bf16.msra.mxu0 0
      %629 = vmatprep.subr.bf16.mxu0 0
      %630 = vmatpush1.bf16.msra.mxu0 0
      %631 = vmatprep.subr.bf16.mxu0 0
      %632 = vmatpush1.bf16.msra.mxu0 0
      %633 = vmatprep.subr.bf16.mxu0 0
      %634 = vmatpush1.bf16.msra.mxu0 0
      %635 = vmatprep.subr.bf16.mxu0 0
      %636 = vmatpush1.bf16.msra.mxu0 0
      %637 = vmatprep.subr.bf16.mxu0 0
      %638 = vmatpush1.bf16.msra.mxu0 0
      %639 = vmatprep.subr.bf16.mxu0 0
      %640 = vmatpush1.bf16.msra.mxu0 0
      %641 = vmatprep.subr.bf16.mxu0 0
      %642 = vmatpush1.bf16.msra.mxu0 0
      %643 = vmatprep.subr.bf16.mxu0 0
      %644 = vmatpush1.bf16.msra.mxu0 0
      %645 = vmatprep.mubr.bf16.mxu0 0
      %646 = vmatmul.mubr.bf16.gmra.mrb[0].mxu0 %v373
      %v647 = vpop.f32.mrb[0].mxu0
      %v648 = vadd.f32 %v303, %v647
      %v649 = vpop.f32.mrb[0].mxu0
      %v650 = vpop.f32.mrb[0].mxu0
      %v651 = vadd.f32 %v303, %v650
      %v652 = vpop.f32.mrb[0].mxu0
      %653 = vmatprep.mubr.bf16.mxu0 0
      %654 = vmatmul.mubr.bf16.gmra.mrb[0].mxu0 %v376
      %v655 = vpop.f32.mrb[0].mxu0
      %v656 = vadd.f32 %v303, %v655
      %v657 = vpop.f32.mrb[0].mxu0
      %v658 = vpop.f32.mrb[0].mxu0
      %v659 = vadd.f32 %v303, %v658
      %v660 = vpop.f32.mrb[0].mxu0
      %661 = vmatprep.mubr.bf16.mxu0 0
      %662 = vmatmul.mubr.bf16.gmra.mrb[0].mxu0 %v379
      %v663 = vpop.f32.mrb[0].mxu0
      %v664 = vadd.f32 %v303, %v663
      %v665 = vpop.f32.mrb[0].mxu0
      %v666 = vpop.f32.mrb[0].mxu0
      %v667 = vadd.f32 %v303, %v666
      %v668 = vpop.f32.mrb[0].mxu0
      %669 = vmatprep.mubr.bf16.mxu0 0
      %670 = vmatmul.mubr.bf16.gmra.mrb[0].mxu0 %v382
      %v671 = vpop.f32.mrb[0].mxu0
      %v672 = vadd.f32 %v303, %v671
      %v673 = vpop.f32.mrb[0].mxu0
      %v674 = vpop.f32.mrb[0].mxu0
      %v675 = vadd.f32 %v303, %v674
      %v676 = vpop.f32.mrb[0].mxu0
      %677 = vmatprep.mubr.bf16.mxu0 0
      %678 = vmatmul.mubr.bf16.gmra.mrb[0].mxu0 %v385
      %v679 = vpop.f32.mrb[0].mxu0
      %v680 = vadd.f32 %v303, %v679
      %v681 = vpop.f32.mrb[0].mxu0
      %v682 = vpop.f32.mrb[0].mxu0
      %v683 = vadd.f32 %v303, %v682
      %v684 = vpop.f32.mrb[0].mxu0
      %685 = vmatprep.mubr.bf16.mxu0 0
      %686 = vmatmul.mubr.bf16.gmra.mrb[0].mxu0 %v388
      %v687 = vpop.f32.mrb[0].mxu0
      %v688 = vadd.f32 %v303, %v687
      %v689 = vpop.f32.mrb[0].mxu0
      %v690 = vpop.f32.mrb[0].mxu0
      %v691 = vadd.f32 %v303, %v690
      %v692 = vpop.f32.mrb[0].mxu0
      %693 = vmatprep.mubr.bf16.mxu0 0
      %694 = vmatmul.mubr.bf16.gmra.mrb[0].mxu0 %v391
      %v695 = vpop.f32.mrb[0].mxu0
      %v696 = vadd.f32 %v303, %v695
      %v697 = vpop.f32.mrb[0].mxu0
      %v698 = vpop.f32.mrb[0].mxu0
      %v699 = vadd.f32 %v303, %v698
      %v700 = vpop.f32.mrb[0].mxu0
      %701 = vmatprep.mubr.bf16.mxu0 0
      %702 = vmatmul.mubr.bf16.gmra.mrb[0].mxu0 %v394
      %v703 = vpop.f32.mrb[0].mxu0
      %v704 = vadd.f32 %v303, %v703
      %v705 = vpop.f32.mrb[0].mxu0
      %v706 = vpop.f32.mrb[0].mxu0
      %v707 = vadd.f32 %v303, %v706
      %v708 = vpop.f32.mrb[0].mxu0
      %709 = vmatprep.mubr.bf16.mxu0 0
      %710 = vmatmul.mubr.bf16.gmra.mrb[0].mxu0 %v397
      %v711 = vpop.f32.mrb[0].mxu0
      %v712 = vadd.f32 %v303, %v711
      %v713 = vpop.f32.mrb[0].mxu0
      %v714 = vpop.f32.mrb[0].mxu0
      %v715 = vadd.f32 %v303, %v714
      %v716 = vpop.f32.mrb[0].mxu0
      %717 = vmatprep.mubr.bf16.mxu0 0
      %718 = vmatmul.mubr.bf16.gmra.mrb[0].mxu0 %v400
      %v719 = vpop.f32.mrb[0].mxu0
      %v720 = vadd.f32 %v303, %v719
      %v721 = vpop.f32.mrb[0].mxu0
      %v722 = vpop.f32.mrb[0].mxu0
      %v723 = vadd.f32 %v303, %v722
      %v724 = vpop.f32.mrb[0].mxu0
      %725 = vmatprep.mubr.bf16.mxu0 0
      %726 = vmatmul.mubr.bf16.gmra.mrb[0].mxu0 %v403
      %v727 = vpop.f32.mrb[0].mxu0
      %v728 = vadd.f32 %v303, %v727
      %v729 = vpop.f32.mrb[0].mxu0
      %v730 = vpop.f32.mrb[0].mxu0
      %v731 = vadd.f32 %v303, %v730
      %v732 = vpop.f32.mrb[0].mxu0
      %733 = vmatprep.mubr.bf16.mxu0 0
      %734 = vmatmul.mubr.bf16.gmra.mrb[0].mxu0 %v406
      %v735 = vpop.f32.mrb[0].mxu0
      %v736 = vadd.f32 %v303, %v735
      %v737 = vpop.f32.mrb[0].mxu0
      %v738 = vpop.f32.mrb[0].mxu0
      %v739 = vadd.f32 %v303, %v738
      %v740 = vpop.f32.mrb[0].mxu0
      %741 = vmatprep.mubr.bf16.mxu0 0
      %742 = vmatmul.mubr.bf16.gmra.mrb[0].mxu0 %v409
      %v743 = vpop.f32.mrb[0].mxu0
      %v744 = vadd.f32 %v303, %v743
      %v745 = vpop.f32.mrb[0].mxu0
      %v746 = vpop.f32.mrb[0].mxu0
      %v747 = vadd.f32 %v303, %v746
      %v748 = vpop.f32.mrb[0].mxu0
      %749 = vmatprep.mubr.bf16.mxu0 0
      %750 = vmatmul.mubr.bf16.gmra.mrb[0].mxu0 %v412
      %v751 = vpop.f32.mrb[0].mxu0
      %v752 = vadd.f32 %v303, %v751
      %v753 = vpop.f32.mrb[0].mxu0
      %v754 = vpop.f32.mrb[0].mxu0
      %v755 = vadd.f32 %v303, %v754
      %v756 = vpop.f32.mrb[0].mxu0
      %757 = vmatprep.mubr.bf16.mxu0 0
      %758 = vmatmul.mubr.bf16.gmra.mrb[0].mxu0 %v415
      %v759 = vpop.f32.mrb[0].mxu0
      %v760 = vadd.f32 %v303, %v759
      %v761 = vpop.f32.mrb[0].mxu0
      %v762 = vpop.f32.mrb[0].mxu0
      %v763 = vadd.f32 %v303, %v762
      %v764 = vpop.f32.mrb[0].mxu0
      %765 = vmatprep.mubr.bf16.mxu0 0
      %766 = vmatmul.mubr.bf16.gmra.mrb[0].mxu0 %v418
      %v767 = vpop.f32.mrb[0].mxu0
      %v768 = vadd.f32 %v303, %v767
      %v769 = vpop.f32.mrb[0].mxu0
      %v770 = vpop.f32.mrb[0].mxu0
      %v771 = vadd.f32 %v303, %v770
      %v772 = vpop.f32.mrb[0].mxu0
      %773 = vdwg.mxu0
      %v774 = vpack.c.bf16 %v459, %v455
      %v775 = vpack.c.bf16 %v469, %v465
      %v776 = vpack.c.bf16 %v479, %v475
      %v777 = vpack.c.bf16 %v489, %v485
      %v778 = vpack.c.bf16 %v499, %v495
      %v779 = vpack.c.bf16 %v509, %v505
      %v780 = vpack.c.bf16 %v519, %v515
      %v781 = vpack.c.bf16 %v529, %v525
      %v782 = vpack.c.bf16 %v539, %v535
      %v783 = vpack.c.bf16 %v549, %v545
      %v784 = vpack.c.bf16 %v559, %v555
      %v785 = vpack.c.bf16 %v569, %v565
      %v786 = vpack.c.bf16 %v579, %v575
      %v787 = vpack.c.bf16 %v589, %v585
      %v788 = vpack.c.bf16 %v599, %v595
      %v789 = vpack.c.bf16 %v609, %v605
      %v790 = vpack.c.bf16 %v461, %v457
      %v791 = vpack.c.bf16 %v471, %v467
      %v792 = vpack.c.bf16 %v481, %v477
      %v793 = vpack.c.bf16 %v491, %v487
      %v794 = vpack.c.bf16 %v501, %v497
      %v795 = vpack.c.bf16 %v511, %v507
      %v796 = vpack.c.bf16 %v521, %v517
      %v797 = vpack.c.bf16 %v531, %v527
      %v798 = vpack.c.bf16 %v541, %v537
      %v799 = vpack.c.bf16 %v551, %v547
      %v800 = vpack.c.bf16 %v561, %v557
      %v801 = vpack.c.bf16 %v571, %v567
      %v802 = vpack.c.bf16 %v581, %v577
      %v803 = vpack.c.bf16 %v591, %v587
      %v804 = vpack.c.bf16 %v601, %v597
      %v805 = vpack.c.bf16 %v611, %v607
      %v806 = vpack.c.bf16 %v651, %v648
      %v807 = vpack.c.bf16 %v659, %v656
      %v808 = vpack.c.bf16 %v667, %v664
      %v809 = vpack.c.bf16 %v675, %v672
      %v810 = vpack.c.bf16 %v683, %v680
      %v811 = vpack.c.bf16 %v691, %v688
      %v812 = vpack.c.bf16 %v699, %v696
      %v813 = vpack.c.bf16 %v707, %v704
      %v814 = vpack.c.bf16 %v715, %v712
      %v815 = vpack.c.bf16 %v723, %v720
      %v816 = vpack.c.bf16 %v731, %v728
      %v817 = vpack.c.bf16 %v739, %v736
      %v818 = vpack.c.bf16 %v747, %v744
      %v819 = vpack.c.bf16 %v755, %v752
      %v820 = vpack.c.bf16 %v763, %v760
      %v821 = vpack.c.bf16 %v771, %v768
      %822 = vmatprep.subr.bf16.mxu0 0
      %823 = vmatpush1.bf16.xpose.msra.mxu0 %v790
      %824 = vmatprep.subr.bf16.mxu0 0
      %825 = vmatpush1.bf16.xpose.msra.mxu0 %v791
      %826 = vmatprep.subr.bf16.mxu0 0
      %827 = vmatpush1.bf16.xpose.msra.mxu0 %v792
      %828 = vmatprep.subr.bf16.mxu0 0
      %829 = vmatpush1.bf16.xpose.msra.mxu0 %v793
      %830 = vmatprep.subr.bf16.mxu0 0
      %831 = vmatpush1.bf16.xpose.msra.mxu0 0
      %832 = vmatprep.subr.bf16.mxu0 0
      %833 = vmatpush1.bf16.xpose.msra.mxu0 0
      %834 = vmatprep.subr.bf16.mxu0 0
      %835 = vmatpush1.bf16.xpose.msra.mxu0 0
      %836 = vmatprep.subr.bf16.mxu0 0
      %837 = vmatpush1.bf16.xpose.msra.mxu0 0
      %838 = vmatprep.subr.bf16.mxu0 0
      %839 = vmatpush1.bf16.xpose.msra.mxu0 0
      %840 = vmatprep.subr.bf16.mxu0 0
      %841 = vmatpush1.bf16.xpose.msra.mxu0 0
      %842 = vmatprep.subr.bf16.mxu0 0
      %843 = vmatpush1.bf16.xpose.msra.mxu0 0
      %844 = vmatprep.subr.bf16.mxu0 0
      %845 = vmatpush1.bf16.xpose.msra.mxu0 0
      %846 = vmatprep.subr.bf16.mxu0 0
      %847 = vmatpush1.bf16.xpose.msra.mxu0 0
      %848 = vmatprep.subr.bf16.mxu0 0
      %849 = vmatpush1.bf16.xpose.msra.mxu0 0
      %850 = vmatprep.subr.bf16.mxu0 0
      %851 = vmatpush1.bf16.xpose.msra.mxu0 0
      %852 = vmatprep.subr.bf16.mxu0 0
      %853 = vmatpush1.bf16.xpose.msra.mxu0 0
      %854 = vmatprep.mubr.bf16.mxu0 0
      %855 = vmatmul.mubr.bf16.gmra.mrb[0].mxu0 %v774
      %v856 = vpop.f32.mrb[0].mxu0
      %v857 = vadd.f32 0.0, %v856
      %v858 = vpop.f32.mrb[0].mxu0
      %v859 = vpop.f32.mrb[0].mxu0
      %v860 = vadd.f32 0.0, %v859
      %v861 = vpop.f32.mrb[0].mxu0
      %862 = vmatprep.mubr.bf16.mxu0 0
      %863 = vmatmul.mubr.bf16.gmra.mrb[0].mxu0 %v775
      %v864 = vpop.f32.mrb[0].mxu0
      %v865 = vadd.f32 0.0, %v864
      %v866 = vpop.f32.mrb[0].mxu0
      %v867 = vpop.f32.mrb[0].mxu0
      %v868 = vadd.f32 0.0, %v867
      %v869 = vpop.f32.mrb[0].mxu0
      %870 = vmatprep.mubr.bf16.mxu0 0
      %871 = vmatmul.mubr.bf16.gmra.mrb[0].mxu0 %v776
      %v872 = vpop.f32.mrb[0].mxu0
      %v873 = vadd.f32 0.0, %v872
      %v874 = vpop.f32.mrb[0].mxu0
      %v875 = vpop.f32.mrb[0].mxu0
      %v876 = vadd.f32 0.0, %v875
      %v877 = vpop.f32.mrb[0].mxu0
      %878 = vmatprep.mubr.bf16.mxu0 0
      %879 = vmatmul.mubr.bf16.gmra.mrb[0].mxu0 %v777
      %v880 = vpop.f32.mrb[0].mxu0
      %v881 = vadd.f32 0.0, %v880
      %v882 = vpop.f32.mrb[0].mxu0
      %v883 = vpop.f32.mrb[0].mxu0
      %v884 = vadd.f32 0.0, %v883
      %v885 = vpop.f32.mrb[0].mxu0
      %886 = vdwg.mxu0
      %887 = vmatprep.subr.bf16.mxu0 0
      %888 = vmatpush1.bf16.xpose.msra.mxu0 %v794
      %889 = vmatprep.subr.bf16.mxu0 0
      %890 = vmatpush1.bf16.xpose.msra.mxu0 %v795
      %891 = vmatprep.subr.bf16.mxu0 0
      %892 = vmatpush1.bf16.xpose.msra.mxu0 %v796
      %893 = vmatprep.subr.bf16.mxu0 0
      %894 = vmatpush1.bf16.xpose.msra.mxu0 %v797
      %895 = vmatprep.subr.bf16.mxu0 0
      %896 = vmatpush1.bf16.xpose.msra.mxu0 0
      %897 = vmatprep.subr.bf16.mxu0 0
      %898 = vmatpush1.bf16.xpose.msra.mxu0 0
      %899 = vmatprep.subr.bf16.mxu0 0
      %900 = vmatpush1.bf16.xpose.msra.mxu0 0
      %901 = vmatprep.subr.bf16.mxu0 0
      %902 = vmatpush1.bf16.xpose.msra.mxu0 0
      %903 = vmatprep.subr.bf16.mxu0 0
      %904 = vmatpush1.bf16.xpose.msra.mxu0 0
      %905 = vmatprep.subr.bf16.mxu0 0
      %906 = vmatpush1.bf16.xpose.msra.mxu0 0
      %907 = vmatprep.subr.bf16.mxu0 0
      %908 = vmatpush1.bf16.xpose.msra.mxu0 0
      %909 = vmatprep.subr.bf16.mxu0 0
      %910 = vmatpush1.bf16.xpose.msra.mxu0 0
      %911 = vmatprep.subr.bf16.mxu0 0
      %912 = vmatpush1.bf16.xpose.msra.mxu0 0
      %913 = vmatprep.subr.bf16.mxu0 0
      %914 = vmatpush1.bf16.xpose.msra.mxu0 0
      %915 = vmatprep.subr.bf16.mxu0 0
      %916 = vmatpush1.bf16.xpose.msra.mxu0 0
      %917 = vmatprep.subr.bf16.mxu0 0
      %918 = vmatpush1.bf16.xpose.msra.mxu0 0
      %919 = vmatprep.mubr.bf16.mxu0 0
      %920 = vmatmul.mubr.bf16.gmra.mrb[0].mxu0 %v778
      %v921 = vpop.f32.mrb[0].mxu0
      %v922 = vadd.f32 0.0, %v921
      %v923 = vpop.f32.mrb[0].mxu0
      %v924 = vpop.f32.mrb[0].mxu0
      %v925 = vadd.f32 0.0, %v924
      %v926 = vpop.f32.mrb[0].mxu0
      %927 = vmatprep.mubr.bf16.mxu0 0
      %928 = vmatmul.mubr.bf16.gmra.mrb[0].mxu0 %v779
      %v929 = vpop.f32.mrb[0].mxu0
      %v930 = vadd.f32 0.0, %v929
      %v931 = vpop.f32.mrb[0].mxu0
      %v932 = vpop.f32.mrb[0].mxu0
      %v933 = vadd.f32 0.0, %v932
      %v934 = vpop.f32.mrb[0].mxu0
      %935 = vmatprep.mubr.bf16.mxu0 0
      %936 = vmatmul.mubr.bf16.gmra.mrb[0].mxu0 %v780
      %v937 = vpop.f32.mrb[0].mxu0
      %v938 = vadd.f32 0.0, %v937
      %v939 = vpop.f32.mrb[0].mxu0
      %v940 = vpop.f32.mrb[0].mxu0
      %v941 = vadd.f32 0.0, %v940
      %v942 = vpop.f32.mrb[0].mxu0
      %943 = vmatprep.mubr.bf16.mxu0 0
      %944 = vmatmul.mubr.bf16.gmra.mrb[0].mxu0 %v781
      %v945 = vpop.f32.mrb[0].mxu0
      %v946 = vadd.f32 0.0, %v945
      %v947 = vpop.f32.mrb[0].mxu0
      %v948 = vpop.f32.mrb[0].mxu0
      %v949 = vadd.f32 0.0, %v948
      %v950 = vpop.f32.mrb[0].mxu0
      %951 = vdwg.mxu0
      %952 = vmatprep.subr.bf16.mxu0 0
      %953 = vmatpush1.bf16.xpose.msra.mxu0 %v798
      %954 = vmatprep.subr.bf16.mxu0 0
      %955 = vmatpush1.bf16.xpose.msra.mxu0 %v799
      %956 = vmatprep.subr.bf16.mxu0 0
      %957 = vmatpush1.bf16.xpose.msra.mxu0 %v800
      %958 = vmatprep.subr.bf16.mxu0 0
      %959 = vmatpush1.bf16.xpose.msra.mxu0 %v801
      %960 = vmatprep.subr.bf16.mxu0 0
      %961 = vmatpush1.bf16.xpose.msra.mxu0 0
      %962 = vmatprep.subr.bf16.mxu0 0
      %963 = vmatpush1.bf16.xpose.msra.mxu0 0
      %964 = vmatprep.subr.bf16.mxu0 0
      %965 = vmatpush1.bf16.xpose.msra.mxu0 0
      %966 = vmatprep.subr.bf16.mxu0 0
      %967 = vmatpush1.bf16.xpose.msra.mxu0 0
      %968 = vmatprep.subr.bf16.mxu0 0
      %969 = vmatpush1.bf16.xpose.msra.mxu0 0
      %970 = vmatprep.subr.bf16.mxu0 0
      %971 = vmatpush1.bf16.xpose.msra.mxu0 0
      %972 = vmatprep.subr.bf16.mxu0 0
      %973 = vmatpush1.bf16.xpose.msra.mxu0 0
      %974 = vmatprep.subr.bf16.mxu0 0
      %975 = vmatpush1.bf16.xpose.msra.mxu0 0
      %976 = vmatprep.subr.bf16.mxu0 0
      %977 = vmatpush1.bf16.xpose.msra.mxu0 0
      %978 = vmatprep.subr.bf16.mxu0 0
      %979 = vmatpush1.bf16.xpose.msra.mxu0 0
      %980 = vmatprep.subr.bf16.mxu0 0
      %981 = vmatpush1.bf16.xpose.msra.mxu0 0
      %982 = vmatprep.subr.bf16.mxu0 0
      %983 = vmatpush1.bf16.xpose.msra.mxu0 0
      %984 = vmatprep.mubr.bf16.mxu0 0
      %985 = vmatmul.mubr.bf16.gmra.mrb[0].mxu0 %v782
      %v986 = vpop.f32.mrb[0].mxu0
      %v987 = vadd.f32 0.0, %v986
      %v988 = vpop.f32.mrb[0].mxu0
      %v989 = vpop.f32.mrb[0].mxu0
      %v990 = vadd.f32 0.0, %v989
      %v991 = vpop.f32.mrb[0].mxu0
      %992 = vmatprep.mubr.bf16.mxu0 0
      %993 = vmatmul.mubr.bf16.gmra.mrb[0].mxu0 %v783
      %v994 = vpop.f32.mrb[0].mxu0
      %v995 = vadd.f32 0.0, %v994
      %v996 = vpop.f32.mrb[0].mxu0
      %v997 = vpop.f32.mrb[0].mxu0
      %v998 = vadd.f32 0.0, %v997
      %v999 = vpop.f32.mrb[0].mxu0
      %1000 = vmatprep.mubr.bf16.mxu0 0
      %1001 = vmatmul.mubr.bf16.gmra.mrb[0].mxu0 %v784
      %v1002 = vpop.f32.mrb[0].mxu0
      %v1003 = vadd.f32 0.0, %v1002
      %v1004 = vpop.f32.mrb[0].mxu0
      %v1005 = vpop.f32.mrb[0].mxu0
      %v1006 = vadd.f32 0.0, %v1005
      %v1007 = vpop.f32.mrb[0].mxu0
      %1008 = vmatprep.mubr.bf16.mxu0 0
      %1009 = vmatmul.mubr.bf16.gmra.mrb[0].mxu0 %v785
      %v1010 = vpop.f32.mrb[0].mxu0
      %v1011 = vadd.f32 0.0, %v1010
      %v1012 = vpop.f32.mrb[0].mxu0
      %v1013 = vpop.f32.mrb[0].mxu0
      %v1014 = vadd.f32 0.0, %v1013
      %v1015 = vpop.f32.mrb[0].mxu0
      %1016 = vdwg.mxu0
      %1017 = vmatprep.subr.bf16.mxu0 0
      %1018 = vmatpush1.bf16.xpose.msra.mxu0 %v802
      %1019 = vmatprep.subr.bf16.mxu0 0
      %1020 = vmatpush1.bf16.xpose.msra.mxu0 %v803
      %1021 = vmatprep.subr.bf16.mxu0 0
      %1022 = vmatpush1.bf16.xpose.msra.mxu0 %v804
      %1023 = vmatprep.subr.bf16.mxu0 0
      %1024 = vmatpush1.bf16.xpose.msra.mxu0 %v805
      %1025 = vmatprep.subr.bf16.mxu0 0
      %1026 = vmatpush1.bf16.xpose.msra.mxu0 0
      %1027 = vmatprep.subr.bf16.mxu0 0
      %1028 = vmatpush1.bf16.xpose.msra.mxu0 0
      %1029 = vmatprep.subr.bf16.mxu0 0
      %1030 = vmatpush1.bf16.xpose.msra.mxu0 0
      %1031 = vmatprep.subr.bf16.mxu0 0
      %1032 = vmatpush1.bf16.xpose.msra.mxu0 0
      %1033 = vmatprep.subr.bf16.mxu0 0
      %1034 = vmatpush1.bf16.xpose.msra.mxu0 0
      %1035 = vmatprep.subr.bf16.mxu0 0
      %1036 = vmatpush1.bf16.xpose.msra.mxu0 0
      %1037 = vmatprep.subr.bf16.mxu0 0
      %1038 = vmatpush1.bf16.xpose.msra.mxu0 0
      %1039 = vmatprep.subr.bf16.mxu0 0
      %1040 = vmatpush1.bf16.xpose.msra.mxu0 0
      %1041 = vmatprep.subr.bf16.mxu0 0
      %1042 = vmatpush1.bf16.xpose.msra.mxu0 0
      %1043 = vmatprep.subr.bf16.mxu0 0
      %1044 = vmatpush1.bf16.xpose.msra.mxu0 0
      %1045 = vmatprep.subr.bf16.mxu0 0
      %1046 = vmatpush1.bf16.xpose.msra.mxu0 0
      %1047 = vmatprep.subr.bf16.mxu0 0
      %1048 = vmatpush1.bf16.xpose.msra.mxu0 0
      %1049 = vmatprep.mubr.bf16.mxu0 0
      %1050 = vmatmul.mubr.bf16.gmra.mrb[0].mxu0 %v786
      %v1051 = vpop.f32.mrb[0].mxu0
      %v1052 = vadd.f32 0.0, %v1051
      %v1053 = vpop.f32.mrb[0].mxu0
      %v1054 = vpop.f32.mrb[0].mxu0
      %v1055 = vadd.f32 0.0, %v1054
      %v1056 = vpop.f32.mrb[0].mxu0
      %1057 = vmatprep.mubr.bf16.mxu0 0
      %1058 = vmatmul.mubr.bf16.gmra.mrb[0].mxu0 %v787
      %v1059 = vpop.f32.mrb[0].mxu0
      %v1060 = vadd.f32 0.0, %v1059
      %v1061 = vpop.f32.mrb[0].mxu0
      %v1062 = vpop.f32.mrb[0].mxu0
      %v1063 = vadd.f32 0.0, %v1062
      %v1064 = vpop.f32.mrb[0].mxu0
      %1065 = vmatprep.mubr.bf16.mxu0 0
      %1066 = vmatmul.mubr.bf16.gmra.mrb[0].mxu0 %v788
      %v1067 = vpop.f32.mrb[0].mxu0
      %v1068 = vadd.f32 0.0, %v1067
      %v1069 = vpop.f32.mrb[0].mxu0
      %v1070 = vpop.f32.mrb[0].mxu0
      %v1071 = vadd.f32 0.0, %v1070
      %v1072 = vpop.f32.mrb[0].mxu0
      %1073 = vmatprep.mubr.bf16.mxu0 0
      %1074 = vmatmul.mubr.bf16.gmra.mrb[0].mxu0 %v789
      %v1075 = vpop.f32.mrb[0].mxu0
      %v1076 = vadd.f32 0.0, %v1075
      %v1077 = vpop.f32.mrb[0].mxu0
      %v1078 = vpop.f32.mrb[0].mxu0
      %v1079 = vadd.f32 0.0, %v1078
      %v1080 = vpop.f32.mrb[0].mxu0
      %1081 = vdwg.mxu0
      %v1082 = vsel %vm371, %v857, -inf
      %1083 = vmax.xlane.f32.xlu0 %v1082
      %v1084 = vpop.xlane.xlu0 %1083
      %v1085 = vsel %vm371, %v860, -inf
      %1086 = vmax.xlane.f32.xlu0 %v1085
      %v1087 = vpop.xlane.xlu0 %1086
      %v1088 = vsel %vm371, %v865, -inf
      %1089 = vmax.xlane.f32.xlu0 %v1088
      %v1090 = vpop.xlane.xlu0 %1089
      %v1091 = vsel %vm371, %v868, -inf
      %1092 = vmax.xlane.f32.xlu0 %v1091
      %v1093 = vpop.xlane.xlu0 %1092
      %v1094 = vsel %vm371, %v873, -inf
      %1095 = vmax.xlane.f32.xlu0 %v1094
      %v1096 = vpop.xlane.xlu0 %1095
      %v1097 = vsel %vm371, %v876, -inf
      %1098 = vmax.xlane.f32.xlu0 %v1097
      %v1099 = vpop.xlane.xlu0 %1098
      %v1100 = vsel %vm371, %v881, -inf
      %1101 = vmax.xlane.f32.xlu0 %v1100
      %v1102 = vpop.xlane.xlu0 %1101
      %v1103 = vsel %vm371, %v884, -inf
      %1104 = vmax.xlane.f32.xlu0 %v1103
      %v1105 = vpop.xlane.xlu0 %1104
      %v1106 = vsel %vm371, %v922, -inf
      %1107 = vmax.xlane.f32.xlu0 %v1106
      %v1108 = vpop.xlane.xlu0 %1107
      %v1109 = vsel %vm371, %v925, -inf
      %1110 = vmax.xlane.f32.xlu0 %v1109
      %v1111 = vpop.xlane.xlu0 %1110
      %v1112 = vsel %vm371, %v930, -inf
      %1113 = vmax.xlane.f32.xlu0 %v1112
      %v1114 = vpop.xlane.xlu0 %1113
      %v1115 = vsel %vm371, %v933, -inf
      %1116 = vmax.xlane.f32.xlu0 %v1115
      %v1117 = vpop.xlane.xlu0 %1116
      %v1118 = vsel %vm371, %v938, -inf
      %1119 = vmax.xlane.f32.xlu0 %v1118
      %v1120 = vpop.xlane.xlu0 %1119
      %v1121 = vsel %vm371, %v941, -inf
      %1122 = vmax.xlane.f32.xlu0 %v1121
      %v1123 = vpop.xlane.xlu0 %1122
      %v1124 = vsel %vm371, %v946, -inf
      %1125 = vmax.xlane.f32.xlu0 %v1124
      %v1126 = vpop.xlane.xlu0 %1125
      %v1127 = vsel %vm371, %v949, -inf
      %1128 = vmax.xlane.f32.xlu0 %v1127
      %v1129 = vpop.xlane.xlu0 %1128
      %v1130 = vsel %vm371, %v987, -inf
      %1131 = vmax.xlane.f32.xlu0 %v1130
      %v1132 = vpop.xlane.xlu0 %1131
      %v1133 = vsel %vm371, %v990, -inf
      %1134 = vmax.xlane.f32.xlu0 %v1133
      %v1135 = vpop.xlane.xlu0 %1134
      %v1136 = vsel %vm371, %v995, -inf
      %1137 = vmax.xlane.f32.xlu0 %v1136
      %v1138 = vpop.xlane.xlu0 %1137
      %v1139 = vsel %vm371, %v998, -inf
      %1140 = vmax.xlane.f32.xlu0 %v1139
      %v1141 = vpop.xlane.xlu0 %1140
      %v1142 = vsel %vm371, %v1003, -inf
      %1143 = vmax.xlane.f32.xlu0 %v1142
      %v1144 = vpop.xlane.xlu0 %1143
      %v1145 = vsel %vm371, %v1006, -inf
      %1146 = vmax.xlane.f32.xlu0 %v1145
      %v1147 = vpop.xlane.xlu0 %1146
      %v1148 = vsel %vm371, %v1011, -inf
      %1149 = vmax.xlane.f32.xlu0 %v1148
      %v1150 = vpop.xlane.xlu0 %1149
      %v1151 = vsel %vm371, %v1014, -inf
      %1152 = vmax.xlane.f32.xlu0 %v1151
      %v1153 = vpop.xlane.xlu0 %1152
      %v1154 = vsel %vm371, %v1052, -inf
      %1155 = vmax.xlane.f32.xlu0 %v1154
      %v1156 = vpop.xlane.xlu0 %1155
      %v1157 = vsel %vm371, %v1055, -inf
      %1158 = vmax.xlane.f32.xlu0 %v1157
      %v1159 = vpop.xlane.xlu0 %1158
      %v1160 = vsel %vm371, %v1060, -inf
      %1161 = vmax.xlane.f32.xlu0 %v1160
      %v1162 = vpop.xlane.xlu0 %1161
      %v1163 = vsel %vm371, %v1063, -inf
      %1164 = vmax.xlane.f32.xlu0 %v1163
      %v1165 = vpop.xlane.xlu0 %1164
      %v1166 = vsel %vm371, %v1068, -inf
      %1167 = vmax.xlane.f32.xlu0 %v1166
      %v1168 = vpop.xlane.xlu0 %1167
      %v1169 = vsel %vm371, %v1071, -inf
      %1170 = vmax.xlane.f32.xlu0 %v1169
      %v1171 = vpop.xlane.xlu0 %1170
      %v1172 = vsel %vm371, %v1076, -inf
      %1173 = vmax.xlane.f32.xlu0 %v1172
      %v1174 = vpop.xlane.xlu0 %1173
      %v1175 = vsel %vm371, %v1079, -inf
      %1176 = vmax.xlane.f32.xlu0 %v1175
      %v1177 = vpop.xlane.xlu0 %1176
      %v1178 = vsub.f32 %v857, %v1084
      %v1179 = vsub.f32 %v860, %v1087
      %v1180 = vsub.f32 %v865, %v1090
      %v1181 = vsub.f32 %v868, %v1093
      %v1182 = vsub.f32 %v873, %v1096
      %v1183 = vsub.f32 %v876, %v1099
      %v1184 = vsub.f32 %v881, %v1102
      %v1185 = vsub.f32 %v884, %v1105
      %v1186 = vsub.f32 %v922, %v1108
      %v1187 = vsub.f32 %v925, %v1111
      %v1188 = vsub.f32 %v930, %v1114
      %v1189 = vsub.f32 %v933, %v1117
      %v1190 = vsub.f32 %v938, %v1120
      %v1191 = vsub.f32 %v941, %v1123
      %v1192 = vsub.f32 %v946, %v1126
      %v1193 = vsub.f32 %v949, %v1129
      %v1194 = vsub.f32 %v987, %v1132
      %v1195 = vsub.f32 %v990, %v1135
      %v1196 = vsub.f32 %v995, %v1138
      %v1197 = vsub.f32 %v998, %v1141
      %v1198 = vsub.f32 %v1003, %v1144
      %v1199 = vsub.f32 %v1006, %v1147
      %v1200 = vsub.f32 %v1011, %v1150
      %v1201 = vsub.f32 %v1014, %v1153
      %v1202 = vsub.f32 %v1052, %v1156
      %v1203 = vsub.f32 %v1055, %v1159
      %v1204 = vsub.f32 %v1060, %v1162
      %v1205 = vsub.f32 %v1063, %v1165
      %v1206 = vsub.f32 %v1068, %v1168
      %v1207 = vsub.f32 %v1071, %v1171
      %v1208 = vsub.f32 %v1076, %v1174
      %v1209 = vsub.f32 %v1079, %v1177
      %v1210 = vpack.c.bf16 %v1179, %v1178
      %v1211 = vpack.c.bf16 %v1181, %v1180
      %v1212 = vpack.c.bf16 %v1183, %v1182
      %v1213 = vpack.c.bf16 %v1185, %v1184
      %v1214 = vpack.c.bf16 %v1187, %v1186
      %v1215 = vpack.c.bf16 %v1189, %v1188
      %v1216 = vpack.c.bf16 %v1191, %v1190
      %v1217 = vpack.c.bf16 %v1193, %v1192
      %v1218 = vpack.c.bf16 %v1195, %v1194
      %v1219 = vpack.c.bf16 %v1197, %v1196
      %v1220 = vpack.c.bf16 %v1199, %v1198
      %v1221 = vpack.c.bf16 %v1201, %v1200
      %v1222 = vpack.c.bf16 %v1203, %v1202
      %v1223 = vpack.c.bf16 %v1205, %v1204
      %v1224 = vpack.c.bf16 %v1207, %v1206
      %v1225 = vpack.c.bf16 %v1209, %v1208
      %v1227 = vmul.bf16 %v1210, 1069105081
      %v1228 = vpow.bf16.pop %v1227
      %v1230 = vmul.bf16 %v1211, 1069105081
      %v1231 = vpow.bf16.pop %v1230
      %v1233 = vmul.bf16 %v1212, 1069105081
      %v1234 = vpow.bf16.pop %v1233
      %v1236 = vmul.bf16 %v1213, 1069105081
      %v1237 = vpow.bf16.pop %v1236
      %v1239 = vmul.bf16 %v1214, 1069105081
      %v1240 = vpow.bf16.pop %v1239
      %v1242 = vmul.bf16 %v1215, 1069105081
      %v1243 = vpow.bf16.pop %v1242
      %v1245 = vmul.bf16 %v1216, 1069105081
      %v1246 = vpow.bf16.pop %v1245
      %v1248 = vmul.bf16 %v1217, 1069105081
      %v1249 = vpow.bf16.pop %v1248
      %v1251 = vmul.bf16 %v1218, 1069105081
      %v1252 = vpow.bf16.pop %v1251
      %v1254 = vmul.bf16 %v1219, 1069105081
      %v1255 = vpow.bf16.pop %v1254
      %v1257 = vmul.bf16 %v1220, 1069105081
      %v1258 = vpow.bf16.pop %v1257
      %v1260 = vmul.bf16 %v1221, 1069105081
      %v1261 = vpow.bf16.pop %v1260
      %v1263 = vmul.bf16 %v1222, 1069105081
      %v1264 = vpow.bf16.pop %v1263
      %v1266 = vmul.bf16 %v1223, 1069105081
      %v1267 = vpow.bf16.pop %v1266
      %v1269 = vmul.bf16 %v1224, 1069105081
      %v1270 = vpow.bf16.pop %v1269
      %v1272 = vmul.bf16 %v1225, 1069105081
      %v1273 = vpow.bf16.pop %v1272
      %v1274 = vunpack.c.l.bf16 %v1228
      %v1275 = vunpack.c.h.bf16 %v1228
      %v1276 = vunpack.c.l.bf16 %v1231
      %v1277 = vunpack.c.h.bf16 %v1231
      %v1278 = vunpack.c.l.bf16 %v1234
      %v1279 = vunpack.c.h.bf16 %v1234
      %v1280 = vunpack.c.l.bf16 %v1237
      %v1281 = vunpack.c.h.bf16 %v1237
      %v1282 = vunpack.c.l.bf16 %v1240
      %v1283 = vunpack.c.h.bf16 %v1240
      %v1284 = vunpack.c.l.bf16 %v1243
      %v1285 = vunpack.c.h.bf16 %v1243
      %v1286 = vunpack.c.l.bf16 %v1246
      %v1287 = vunpack.c.h.bf16 %v1246
      %v1288 = vunpack.c.l.bf16 %v1249
      %v1289 = vunpack.c.h.bf16 %v1249
      %v1290 = vunpack.c.l.bf16 %v1252
      %v1291 = vunpack.c.h.bf16 %v1252
      %v1292 = vunpack.c.l.bf16 %v1255
      %v1293 = vunpack.c.h.bf16 %v1255
      %v1294 = vunpack.c.l.bf16 %v1258
      %v1295 = vunpack.c.h.bf16 %v1258
      %v1296 = vunpack.c.l.bf16 %v1261
      %v1297 = vunpack.c.h.bf16 %v1261
      %v1298 = vunpack.c.l.bf16 %v1264
      %v1299 = vunpack.c.h.bf16 %v1264
      %v1300 = vunpack.c.l.bf16 %v1267
      %v1301 = vunpack.c.h.bf16 %v1267
      %v1302 = vunpack.c.l.bf16 %v1270
      %v1303 = vunpack.c.h.bf16 %v1270
      %v1304 = vunpack.c.l.bf16 %v1273
      %v1305 = vunpack.c.h.bf16 %v1273
      %v1306 = vsel %vm371, %v1274, 0.0
      %1307 = vadd.xlane.f32.xlu0 %v1306
      %v1308 = vpop.xlane.xlu0 %1307
      %v1309 = vsel %vm371, %v1275, 0.0
      %1310 = vadd.xlane.f32.xlu0 %v1309
      %v1311 = vpop.xlane.xlu0 %1310
      %v1312 = vsel %vm371, %v1276, 0.0
      %1313 = vadd.xlane.f32.xlu0 %v1312
      %v1314 = vpop.xlane.xlu0 %1313
      %v1315 = vsel %vm371, %v1277, 0.0
      %1316 = vadd.xlane.f32.xlu0 %v1315
      %v1317 = vpop.xlane.xlu0 %1316
      %v1318 = vsel %vm371, %v1278, 0.0
      %1319 = vadd.xlane.f32.xlu0 %v1318
      %v1320 = vpop.xlane.xlu0 %1319
      %v1321 = vsel %vm371, %v1279, 0.0
      %1322 = vadd.xlane.f32.xlu0 %v1321
      %v1323 = vpop.xlane.xlu0 %1322
      %v1324 = vsel %vm371, %v1280, 0.0
      %1325 = vadd.xlane.f32.xlu0 %v1324
      %v1326 = vpop.xlane.xlu0 %1325
      %v1327 = vsel %vm371, %v1281, 0.0
      %1328 = vadd.xlane.f32.xlu0 %v1327
      %v1329 = vpop.xlane.xlu0 %1328
      %v1330 = vsel %vm371, %v1282, 0.0
      %1331 = vadd.xlane.f32.xlu0 %v1330
      %v1332 = vpop.xlane.xlu0 %1331
      %v1333 = vsel %vm371, %v1283, 0.0
      %1334 = vadd.xlane.f32.xlu0 %v1333
      %v1335 = vpop.xlane.xlu0 %1334
      %v1336 = vsel %vm371, %v1284, 0.0
      %1337 = vadd.xlane.f32.xlu0 %v1336
      %v1338 = vpop.xlane.xlu0 %1337
      %v1339 = vsel %vm371, %v1285, 0.0
      %1340 = vadd.xlane.f32.xlu0 %v1339
      %v1341 = vpop.xlane.xlu0 %1340
      %v1342 = vsel %vm371, %v1286, 0.0
      %1343 = vadd.xlane.f32.xlu0 %v1342
      %v1344 = vpop.xlane.xlu0 %1343
      %v1345 = vsel %vm371, %v1287, 0.0
      %1346 = vadd.xlane.f32.xlu0 %v1345
      %v1347 = vpop.xlane.xlu0 %1346
      %v1348 = vsel %vm371, %v1288, 0.0
      %1349 = vadd.xlane.f32.xlu0 %v1348
      %v1350 = vpop.xlane.xlu0 %1349
      %v1351 = vsel %vm371, %v1289, 0.0
      %1352 = vadd.xlane.f32.xlu0 %v1351
      %v1353 = vpop.xlane.xlu0 %1352
      %v1354 = vsel %vm371, %v1290, 0.0
      %1355 = vadd.xlane.f32.xlu0 %v1354
      %v1356 = vpop.xlane.xlu0 %1355
      %v1357 = vsel %vm371, %v1291, 0.0
      %1358 = vadd.xlane.f32.xlu0 %v1357
      %v1359 = vpop.xlane.xlu0 %1358
      %v1360 = vsel %vm371, %v1292, 0.0
      %1361 = vadd.xlane.f32.xlu0 %v1360
      %v1362 = vpop.xlane.xlu0 %1361
      %v1363 = vsel %vm371, %v1293, 0.0
      %1364 = vadd.xlane.f32.xlu0 %v1363
      %v1365 = vpop.xlane.xlu0 %1364
      %v1366 = vsel %vm371, %v1294, 0.0
      %1367 = vadd.xlane.f32.xlu0 %v1366
      %v1368 = vpop.xlane.xlu0 %1367
      %v1369 = vsel %vm371, %v1295, 0.0
      %1370 = vadd.xlane.f32.xlu0 %v1369
      %v1371 = vpop.xlane.xlu0 %1370
      %v1372 = vsel %vm371, %v1296, 0.0
      %1373 = vadd.xlane.f32.xlu0 %v1372
      %v1374 = vpop.xlane.xlu0 %1373
      %v1375 = vsel %vm371, %v1297, 0.0
      %1376 = vadd.xlane.f32.xlu0 %v1375
      %v1377 = vpop.xlane.xlu0 %1376
      %v1378 = vsel %vm371, %v1298, 0.0
      %1379 = vadd.xlane.f32.xlu0 %v1378
      %v1380 = vpop.xlane.xlu0 %1379
      %v1381 = vsel %vm371, %v1299, 0.0
      %1382 = vadd.xlane.f32.xlu0 %v1381
      %v1383 = vpop.xlane.xlu0 %1382
      %v1384 = vsel %vm371, %v1300, 0.0
      %1385 = vadd.xlane.f32.xlu0 %v1384
      %v1386 = vpop.xlane.xlu0 %1385
      %v1387 = vsel %vm371, %v1301, 0.0
      %1388 = vadd.xlane.f32.xlu0 %v1387
      %v1389 = vpop.xlane.xlu0 %1388
      %v1390 = vsel %vm371, %v1302, 0.0
      %1391 = vadd.xlane.f32.xlu0 %v1390
      %v1392 = vpop.xlane.xlu0 %1391
      %v1393 = vsel %vm371, %v1303, 0.0
      %1394 = vadd.xlane.f32.xlu0 %v1393
      %v1395 = vpop.xlane.xlu0 %1394
      %v1396 = vsel %vm371, %v1304, 0.0
      %1397 = vadd.xlane.f32.xlu0 %v1396
      %v1398 = vpop.xlane.xlu0 %1397
      %v1399 = vsel %vm371, %v1305, 0.0
      %1400 = vadd.xlane.f32.xlu0 %v1399
      %v1401 = vpop.xlane.xlu0 %1400
      %v1403 = vsel %vm371, %v1228, 0
      %v1406 = vsel %vm371, %v1231, 0
      %v1409 = vsel %vm371, %v1234, 0
      %v1412 = vsel %vm371, %v1237, 0
      %1414 = vmatprep.subr.bf16.mxu0 0
      %1415 = vmatpush1.bf16.msra.mxu0 %v806
      %1416 = vmatprep.subr.bf16.mxu0 0
      %1417 = vmatpush1.bf16.msra.mxu0 %v807
      %1418 = vmatprep.subr.bf16.mxu0 0
      %1419 = vmatpush1.bf16.msra.mxu0 %v808
      %1420 = vmatprep.subr.bf16.mxu0 0
      %1421 = vmatpush1.bf16.msra.mxu0 %v809
      %1422 = vmatprep.subr.bf16.mxu0 0
      %1423 = vmatpush1.bf16.msra.mxu0 0
      %1424 = vmatprep.subr.bf16.mxu0 0
      %1425 = vmatpush1.bf16.msra.mxu0 0
      %1426 = vmatprep.subr.bf16.mxu0 0
      %1427 = vmatpush1.bf16.msra.mxu0 0
      %1428 = vmatprep.subr.bf16.mxu0 0
      %1429 = vmatpush1.bf16.msra.mxu0 0
      %1430 = vmatprep.subr.bf16.mxu0 0
      %1431 = vmatpush1.bf16.msra.mxu0 0
      %1432 = vmatprep.subr.bf16.mxu0 0
      %1433 = vmatpush1.bf16.msra.mxu0 0
      %1434 = vmatprep.subr.bf16.mxu0 0
      %1435 = vmatpush1.bf16.msra.mxu0 0
      %1436 = vmatprep.subr.bf16.mxu0 0
      %1437 = vmatpush1.bf16.msra.mxu0 0
      %1438 = vmatprep.subr.bf16.mxu0 0
      %1439 = vmatpush1.bf16.msra.mxu0 0
      %1440 = vmatprep.subr.bf16.mxu0 0
      %1441 = vmatpush1.bf16.msra.mxu0 0
      %1442 = vmatprep.subr.bf16.mxu0 0
      %1443 = vmatpush1.bf16.msra.mxu0 0
      %1444 = vmatprep.subr.bf16.mxu0 0
      %1445 = vmatpush1.bf16.msra.mxu0 0
      %1446 = vmatprep.mubr.bf16.mxu0 0
      %1447 = vmatmul.mubr.bf16.gmra.mrb[0].mxu0 %v1403
      %v1448 = vpop.f32.mrb[0].mxu0
      %v1449 = vadd.f32 0.0, %v1448
      %v1450 = vpop.f32.mrb[0].mxu0
      %v1451 = vpop.f32.mrb[0].mxu0
      %v1452 = vadd.f32 0.0, %v1451
      %v1453 = vpop.f32.mrb[0].mxu0
      %1454 = vmatprep.mubr.bf16.mxu0 0
      %1455 = vmatmul.mubr.bf16.gmra.mrb[0].mxu0 %v1406
      %v1456 = vpop.f32.mrb[0].mxu0
      %v1457 = vadd.f32 0.0, %v1456
      %v1458 = vpop.f32.mrb[0].mxu0
      %v1459 = vpop.f32.mrb[0].mxu0
      %v1460 = vadd.f32 0.0, %v1459
      %v1461 = vpop.f32.mrb[0].mxu0
      %1462 = vmatprep.mubr.bf16.mxu0 0
      %1463 = vmatmul.mubr.bf16.gmra.mrb[0].mxu0 %v1409
      %v1464 = vpop.f32.mrb[0].mxu0
      %v1465 = vadd.f32 0.0, %v1464
      %v1466 = vpop.f32.mrb[0].mxu0
      %v1467 = vpop.f32.mrb[0].mxu0
      %v1468 = vadd.f32 0.0, %v1467
      %v1469 = vpop.f32.mrb[0].mxu0
      %1470 = vmatprep.mubr.bf16.mxu0 0
      %1471 = vmatmul.mubr.bf16.gmra.mrb[0].mxu0 %v1412
      %v1472 = vpop.f32.mrb[0].mxu0
      %v1473 = vadd.f32 0.0, %v1472
      %v1474 = vpop.f32.mrb[0].mxu0
      %v1475 = vpop.f32.mrb[0].mxu0
      %v1476 = vadd.f32 0.0, %v1475
      %v1477 = vpop.f32.mrb[0].mxu0
      %1478 = vdwg.mxu0
      %v1480 = vsel %vm371, %v1240, 0
      %v1483 = vsel %vm371, %v1243, 0
      %v1486 = vsel %vm371, %v1246, 0
      %v1489 = vsel %vm371, %v1249, 0
      %1491 = vmatprep.subr.bf16.mxu0 0
      %1492 = vmatpush1.bf16.msra.mxu0 %v810
      %1493 = vmatprep.subr.bf16.mxu0 0
      %1494 = vmatpush1.bf16.msra.mxu0 %v811
      %1495 = vmatprep.subr.bf16.mxu0 0
      %1496 = vmatpush1.bf16.msra.mxu0 %v812
      %1497 = vmatprep.subr.bf16.mxu0 0
      %1498 = vmatpush1.bf16.msra.mxu0 %v813
      %1499 = vmatprep.subr.bf16.mxu0 0
      %1500 = vmatpush1.bf16.msra.mxu0 0
      %1501 = vmatprep.subr.bf16.mxu0 0
      %1502 = vmatpush1.bf16.msra.mxu0 0
      %1503 = vmatprep.subr.bf16.mxu0 0
      %1504 = vmatpush1.bf16.msra.mxu0 0
      %1505 = vmatprep.subr.bf16.mxu0 0
      %1506 = vmatpush1.bf16.msra.mxu0 0
      %1507 = vmatprep.subr.bf16.mxu0 0
      %1508 = vmatpush1.bf16.msra.mxu0 0
      %1509 = vmatprep.subr.bf16.mxu0 0
      %1510 = vmatpush1.bf16.msra.mxu0 0
      %1511 = vmatprep.subr.bf16.mxu0 0
      %1512 = vmatpush1.bf16.msra.mxu0 0
      %1513 = vmatprep.subr.bf16.mxu0 0
      %1514 = vmatpush1.bf16.msra.mxu0 0
      %1515 = vmatprep.subr.bf16.mxu0 0
      %1516 = vmatpush1.bf16.msra.mxu0 0
      %1517 = vmatprep.subr.bf16.mxu0 0
      %1518 = vmatpush1.bf16.msra.mxu0 0
      %1519 = vmatprep.subr.bf16.mxu0 0
      %1520 = vmatpush1.bf16.msra.mxu0 0
      %1521 = vmatprep.subr.bf16.mxu0 0
      %1522 = vmatpush1.bf16.msra.mxu0 0
      %1523 = vmatprep.mubr.bf16.mxu0 0
      %1524 = vmatmul.mubr.bf16.gmra.mrb[0].mxu0 %v1480
      %v1525 = vpop.f32.mrb[0].mxu0
      %v1526 = vadd.f32 0.0, %v1525
      %v1527 = vpop.f32.mrb[0].mxu0
      %v1528 = vpop.f32.mrb[0].mxu0
      %v1529 = vadd.f32 0.0, %v1528
      %v1530 = vpop.f32.mrb[0].mxu0
      %1531 = vmatprep.mubr.bf16.mxu0 0
      %1532 = vmatmul.mubr.bf16.gmra.mrb[0].mxu0 %v1483
      %v1533 = vpop.f32.mrb[0].mxu0
      %v1534 = vadd.f32 0.0, %v1533
      %v1535 = vpop.f32.mrb[0].mxu0
      %v1536 = vpop.f32.mrb[0].mxu0
      %v1537 = vadd.f32 0.0, %v1536
      %v1538 = vpop.f32.mrb[0].mxu0
      %1539 = vmatprep.mubr.bf16.mxu0 0
      %1540 = vmatmul.mubr.bf16.gmra.mrb[0].mxu0 %v1486
      %v1541 = vpop.f32.mrb[0].mxu0
      %v1542 = vadd.f32 0.0, %v1541
      %v1543 = vpop.f32.mrb[0].mxu0
      %v1544 = vpop.f32.mrb[0].mxu0
      %v1545 = vadd.f32 0.0, %v1544
      %v1546 = vpop.f32.mrb[0].mxu0
      %1547 = vmatprep.mubr.bf16.mxu0 0
      %1548 = vmatmul.mubr.bf16.gmra.mrb[0].mxu0 %v1489
      %v1549 = vpop.f32.mrb[0].mxu0
      %v1550 = vadd.f32 0.0, %v1549
      %v1551 = vpop.f32.mrb[0].mxu0
      %v1552 = vpop.f32.mrb[0].mxu0
      %v1553 = vadd.f32 0.0, %v1552
      %v1554 = vpop.f32.mrb[0].mxu0
      %1555 = vdwg.mxu0
      %v1557 = vsel %vm371, %v1252, 0
      %v1560 = vsel %vm371, %v1255, 0
      %v1563 = vsel %vm371, %v1258, 0
      %v1566 = vsel %vm371, %v1261, 0
      %1568 = vmatprep.subr.bf16.mxu0 0
      %1569 = vmatpush1.bf16.msra.mxu0 %v814
      %1570 = vmatprep.subr.bf16.mxu0 0
      %1571 = vmatpush1.bf16.msra.mxu0 %v815
      %1572 = vmatprep.subr.bf16.mxu0 0
      %1573 = vmatpush1.bf16.msra.mxu0 %v816
      %1574 = vmatprep.subr.bf16.mxu0 0
      %1575 = vmatpush1.bf16.msra.mxu0 %v817
      %1576 = vmatprep.subr.bf16.mxu0 0
      %1577 = vmatpush1.bf16.msra.mxu0 0
      %1578 = vmatprep.subr.bf16.mxu0 0
      %1579 = vmatpush1.bf16.msra.mxu0 0
      %1580 = vmatprep.subr.bf16.mxu0 0
      %1581 = vmatpush1.bf16.msra.mxu0 0
      %1582 = vmatprep.subr.bf16.mxu0 0
      %1583 = vmatpush1.bf16.msra.mxu0 0
      %1584 = vmatprep.subr.bf16.mxu0 0
      %1585 = vmatpush1.bf16.msra.mxu0 0
      %1586 = vmatprep.subr.bf16.mxu0 0
      %1587 = vmatpush1.bf16.msra.mxu0 0
      %1588 = vmatprep.subr.bf16.mxu0 0
      %1589 = vmatpush1.bf16.msra.mxu0 0
      %1590 = vmatprep.subr.bf16.mxu0 0
      %1591 = vmatpush1.bf16.msra.mxu0 0
      %1592 = vmatprep.subr.bf16.mxu0 0
      %1593 = vmatpush1.bf16.msra.mxu0 0
      %1594 = vmatprep.subr.bf16.mxu0 0
      %1595 = vmatpush1.bf16.msra.mxu0 0
      %1596 = vmatprep.subr.bf16.mxu0 0
      %1597 = vmatpush1.bf16.msra.mxu0 0
      %1598 = vmatprep.subr.bf16.mxu0 0
      %1599 = vmatpush1.bf16.msra.mxu0 0
      %1600 = vmatprep.mubr.bf16.mxu0 0
      %1601 = vmatmul.mubr.bf16.gmra.mrb[0].mxu0 %v1557
      %v1602 = vpop.f32.mrb[0].mxu0
      %v1603 = vadd.f32 0.0, %v1602
      %v1604 = vpop.f32.mrb[0].mxu0
      %v1605 = vpop.f32.mrb[0].mxu0
      %v1606 = vadd.f32 0.0, %v1605
      %v1607 = vpop.f32.mrb[0].mxu0
      %1608 = vmatprep.mubr.bf16.mxu0 0
      %1609 = vmatmul.mubr.bf16.gmra.mrb[0].mxu0 %v1560
      %v1610 = vpop.f32.mrb[0].mxu0
      %v1611 = vadd.f32 0.0, %v1610
      %v1612 = vpop.f32.mrb[0].mxu0
      %v1613 = vpop.f32.mrb[0].mxu0
      %v1614 = vadd.f32 0.0, %v1613
      %v1615 = vpop.f32.mrb[0].mxu0
      %1616 = vmatprep.mubr.bf16.mxu0 0
      %1617 = vmatmul.mubr.bf16.gmra.mrb[0].mxu0 %v1563
      %v1618 = vpop.f32.mrb[0].mxu0
      %v1619 = vadd.f32 0.0, %v1618
      %v1620 = vpop.f32.mrb[0].mxu0
      %v1621 = vpop.f32.mrb[0].mxu0
      %v1622 = vadd.f32 0.0, %v1621
      %v1623 = vpop.f32.mrb[0].mxu0
      %1624 = vmatprep.mubr.bf16.mxu0 0
      %1625 = vmatmul.mubr.bf16.gmra.mrb[0].mxu0 %v1566
      %v1626 = vpop.f32.mrb[0].mxu0
      %v1627 = vadd.f32 0.0, %v1626
      %v1628 = vpop.f32.mrb[0].mxu0
      %v1629 = vpop.f32.mrb[0].mxu0
      %v1630 = vadd.f32 0.0, %v1629
      %v1631 = vpop.f32.mrb[0].mxu0
      %1632 = vdwg.mxu0
      %v1634 = vsel %vm371, %v1264, 0
      %v1637 = vsel %vm371, %v1267, 0
      %v1640 = vsel %vm371, %v1270, 0
      %v1643 = vsel %vm371, %v1273, 0
      %1645 = vmatprep.subr.bf16.mxu0 0
      %1646 = vmatpush1.bf16.msra.mxu0 %v818
      %1647 = vmatprep.subr.bf16.mxu0 0
      %1648 = vmatpush1.bf16.msra.mxu0 %v819
      %1649 = vmatprep.subr.bf16.mxu0 0
      %1650 = vmatpush1.bf16.msra.mxu0 %v820
      %1651 = vmatprep.subr.bf16.mxu0 0
      %1652 = vmatpush1.bf16.msra.mxu0 %v821
      %1653 = vmatprep.subr.bf16.mxu0 0
      %1654 = vmatpush1.bf16.msra.mxu0 0
      %1655 = vmatprep.subr.bf16.mxu0 0
      %1656 = vmatpush1.bf16.msra.mxu0 0
      %1657 = vmatprep.subr.bf16.mxu0 0
      %1658 = vmatpush1.bf16.msra.mxu0 0
      %1659 = vmatprep.subr.bf16.mxu0 0
      %1660 = vmatpush1.bf16.msra.mxu0 0
      %1661 = vmatprep.subr.bf16.mxu0 0
      %1662 = vmatpush1.bf16.msra.mxu0 0
      %1663 = vmatprep.subr.bf16.mxu0 0
      %1664 = vmatpush1.bf16.msra.mxu0 0
      %1665 = vmatprep.subr.bf16.mxu0 0
      %1666 = vmatpush1.bf16.msra.mxu0 0
      %1667 = vmatprep.subr.bf16.mxu0 0
      %1668 = vmatpush1.bf16.msra.mxu0 0
      %1669 = vmatprep.subr.bf16.mxu0 0
      %1670 = vmatpush1.bf16.msra.mxu0 0
      %1671 = vmatprep.subr.bf16.mxu0 0
      %1672 = vmatpush1.bf16.msra.mxu0 0
      %1673 = vmatprep.subr.bf16.mxu0 0
      %1674 = vmatpush1.bf16.msra.mxu0 0
      %1675 = vmatprep.subr.bf16.mxu0 0
      %1676 = vmatpush1.bf16.msra.mxu0 0
      %1677 = vmatprep.mubr.bf16.mxu0 0
      %1678 = vmatmul.mubr.bf16.gmra.mrb[0].mxu0 %v1634
      %v1679 = vpop.f32.mrb[0].mxu0
      %v1680 = vadd.f32 0.0, %v1679
      %v1681 = vpop.f32.mrb[0].mxu0
      %v1682 = vpop.f32.mrb[0].mxu0
      %v1683 = vadd.f32 0.0, %v1682
      %v1684 = vpop.f32.mrb[0].mxu0
      %1685 = vmatprep.mubr.bf16.mxu0 0
      %1686 = vmatmul.mubr.bf16.gmra.mrb[0].mxu0 %v1637
      %v1687 = vpop.f32.mrb[0].mxu0
      %v1688 = vadd.f32 0.0, %v1687
      %v1689 = vpop.f32.mrb[0].mxu0
      %v1690 = vpop.f32.mrb[0].mxu0
      %v1691 = vadd.f32 0.0, %v1690
      %v1692 = vpop.f32.mrb[0].mxu0
      %1693 = vmatprep.mubr.bf16.mxu0 0
      %1694 = vmatmul.mubr.bf16.gmra.mrb[0].mxu0 %v1640
      %v1695 = vpop.f32.mrb[0].mxu0
      %v1696 = vadd.f32 0.0, %v1695
      %v1697 = vpop.f32.mrb[0].mxu0
      %v1698 = vpop.f32.mrb[0].mxu0
      %v1699 = vadd.f32 0.0, %v1698
      %v1700 = vpop.f32.mrb[0].mxu0
      %1701 = vmatprep.mubr.bf16.mxu0 0
      %1702 = vmatmul.mubr.bf16.gmra.mrb[0].mxu0 %v1643
      %v1703 = vpop.f32.mrb[0].mxu0
      %v1704 = vadd.f32 0.0, %v1703
      %v1705 = vpop.f32.mrb[0].mxu0
      %v1706 = vpop.f32.mrb[0].mxu0
      %v1707 = vadd.f32 0.0, %v1706
      %v1708 = vpop.f32.mrb[0].mxu0
      %1709 = vdwg.mxu0
      %v1710 = vrcp.pop %v1308
      %v1711 = vrcp.pop %v1311
      %v1712 = vrcp.pop %v1314
      %v1713 = vrcp.pop %v1317
      %v1714 = vrcp.pop %v1320
      %v1715 = vrcp.pop %v1323
      %v1716 = vrcp.pop %v1326
      %v1717 = vrcp.pop %v1329
      %v1718 = vrcp.pop %v1332
      %v1719 = vrcp.pop %v1335
      %v1720 = vrcp.pop %v1338
      %v1721 = vrcp.pop %v1341
      %v1722 = vrcp.pop %v1344
      %v1723 = vrcp.pop %v1347
      %v1724 = vrcp.pop %v1350
      %v1725 = vrcp.pop %v1353
      %v1726 = vrcp.pop %v1356
      %v1727 = vrcp.pop %v1359
      %v1728 = vrcp.pop %v1362
      %v1729 = vrcp.pop %v1365
      %v1730 = vrcp.pop %v1368
      %v1731 = vrcp.pop %v1371
      %v1732 = vrcp.pop %v1374
      %v1733 = vrcp.pop %v1377
      %v1734 = vrcp.pop %v1380
      %v1735 = vrcp.pop %v1383
      %v1736 = vrcp.pop %v1386
      %v1737 = vrcp.pop %v1389
      %v1738 = vrcp.pop %v1392
      %v1739 = vrcp.pop %v1395
      %v1740 = vrcp.pop %v1398
      %v1741 = vrcp.pop %v1401
      %v1742 = vmul.f32 %v1449, %v1710
      %v1743 = vmul.f32 %v1452, %v1711
      %v1744 = vmul.f32 %v1457, %v1712
      %v1745 = vmul.f32 %v1460, %v1713
      %v1746 = vmul.f32 %v1465, %v1714
      %v1747 = vmul.f32 %v1468, %v1715
      %v1748 = vmul.f32 %v1473, %v1716
      %v1749 = vmul.f32 %v1476, %v1717
      %v1750 = vmul.f32 %v1526, %v1718
      %v1751 = vmul.f32 %v1529, %v1719
      %v1752 = vmul.f32 %v1534, %v1720
      %v1753 = vmul.f32 %v1537, %v1721
      %v1754 = vmul.f32 %v1542, %v1722
      %v1755 = vmul.f32 %v1545, %v1723
      %v1756 = vmul.f32 %v1550, %v1724
      %v1757 = vmul.f32 %v1553, %v1725
      %v1758 = vmul.f32 %v1603, %v1726
      %v1759 = vmul.f32 %v1606, %v1727
      %v1760 = vmul.f32 %v1611, %v1728
      %v1761 = vmul.f32 %v1614, %v1729
      %v1762 = vmul.f32 %v1619, %v1730
      %v1763 = vmul.f32 %v1622, %v1731
      %v1764 = vmul.f32 %v1627, %v1732
      %v1765 = vmul.f32 %v1630, %v1733
      %v1766 = vmul.f32 %v1680, %v1734
      %v1767 = vmul.f32 %v1683, %v1735
      %v1768 = vmul.f32 %v1688, %v1736
      %v1769 = vmul.f32 %v1691, %v1737
      %v1770 = vmul.f32 %v1696, %v1738
      %v1771 = vmul.f32 %v1699, %v1739
      %v1772 = vmul.f32 %v1704, %v1740
      %v1773 = vmul.f32 %v1707, %v1741
      %v1774 = vpack.c.bf16 %v1743, %v1742
      %v1775 = vpack.c.bf16 %v1745, %v1744
      %v1776 = vpack.c.bf16 %v1747, %v1746
      %v1777 = vpack.c.bf16 %v1749, %v1748
      %v1778 = vpack.c.bf16 %v1751, %v1750
      %v1779 = vpack.c.bf16 %v1753, %v1752
      %v1780 = vpack.c.bf16 %v1755, %v1754
      %v1781 = vpack.c.bf16 %v1757, %v1756
      %v1782 = vpack.c.bf16 %v1759, %v1758
      %v1783 = vpack.c.bf16 %v1761, %v1760
      %v1784 = vpack.c.bf16 %v1763, %v1762
      %v1785 = vpack.c.bf16 %v1765, %v1764
      %v1786 = vpack.c.bf16 %v1767, %v1766
      %v1787 = vpack.c.bf16 %v1769, %v1768
      %v1788 = vpack.c.bf16 %v1771, %v1770
      %v1789 = vpack.c.bf16 %v1773, %v1772
      %v1790 = vld [vmem:[%s3] sm:$0xf]
      %v1791 = vld [vmem:[%s3 + $0x4] sm:$0xf]
      %v1792 = vld [vmem:[%s3 + $0x8] sm:$0xf]
      %v1793 = vld [vmem:[%s3 + $0xc] sm:$0xf]
      %v1794 = vld [vmem:[%s3 + $0x10] sm:$0xf]
      %v1795 = vld [vmem:[%s3 + $0x14] sm:$0xf]
      %v1796 = vld [vmem:[%s3 + $0x18] sm:$0xf]
      %v1797 = vld [vmem:[%s3 + $0x1c] sm:$0xf]
      %v1798 = vld [vmem:[%s3 + $0x20] sm:$0xf]
      %v1799 = vld [vmem:[%s3 + $0x24] sm:$0xf]
      %v1800 = vld [vmem:[%s3 + $0x28] sm:$0xf]
      %v1801 = vld [vmem:[%s3 + $0x2c] sm:$0xf]
      %v1802 = vld [vmem:[%s3 + $0x30] sm:$0xf]
      %v1803 = vld [vmem:[%s3 + $0x34] sm:$0xf]
      %v1804 = vld [vmem:[%s3 + $0x38] sm:$0xf]
      %v1805 = vld [vmem:[%s3 + $0x3c] sm:$0xf]
      %v1806 = vld [vmem:[%s4] sm:$0x1]
      %v1808 = vlaneseq
      %v1809 = vshrl.u32 %v1808, 7
      %v1810 = vsub.s32 0, %v1809
      %v1811 = vrot.slane %v1806, %v1810
      %v1829 = vunpack.c.l.b16 %v1790
      %v1830 = vunpack.c.l.b16 %v1791
      %v1831 = vunpack.c.l.b16 %v1792
      %v1832 = vunpack.c.l.b16 %v1793
      %v1833 = vunpack.c.l.b16 %v1794
      %v1834 = vunpack.c.l.b16 %v1795
      %v1835 = vunpack.c.l.b16 %v1796
      %v1836 = vunpack.c.l.b16 %v1797
      %v1837 = vunpack.c.l.b16 %v1798
      %v1838 = vunpack.c.l.b16 %v1799
      %v1839 = vunpack.c.l.b16 %v1800
      %v1840 = vunpack.c.l.b16 %v1801
      %v1841 = vunpack.c.l.b16 %v1802
      %v1842 = vunpack.c.l.b16 %v1803
      %v1843 = vunpack.c.l.b16 %v1804
      %v1844 = vunpack.c.l.b16 %v1805
      %v1845 = vpack.c.b16 %v1830, %v1829
      %v1846 = vpack.c.b16 %v1832, %v1831
      %v1847 = vpack.c.b16 %v1834, %v1833
      %v1848 = vpack.c.b16 %v1836, %v1835
      %v1849 = vpack.c.b16 %v1838, %v1837
      %v1850 = vpack.c.b16 %v1840, %v1839
      %v1851 = vpack.c.b16 %v1842, %v1841
      %v1852 = vpack.c.b16 %v1844, %v1843
      %1861 = vmatprep.subr.bf16.mxu0 0
      %1862 = vmatpush1.bf16.msra.mxu0 %v1845
      %1863 = vmatprep.subr.bf16.mxu0 0
      %1864 = vmatpush1.bf16.msra.mxu0 %v1846
      %1865 = vmatprep.subr.bf16.mxu0 0
      %1866 = vmatpush1.bf16.msra.mxu0 %v1847
      %1867 = vmatprep.subr.bf16.mxu0 0
      %1868 = vmatpush1.bf16.msra.mxu0 %v1848
      %1869 = vmatprep.subr.bf16.mxu0 0
      %1870 = vmatpush1.bf16.msra.mxu0 %v1849
      %1871 = vmatprep.subr.bf16.mxu0 0
      %1872 = vmatpush1.bf16.msra.mxu0 %v1850
      %1873 = vmatprep.subr.bf16.mxu0 0
      %1874 = vmatpush1.bf16.msra.mxu0 %v1851
      %1875 = vmatprep.subr.bf16.mxu0 0
      %1876 = vmatpush1.bf16.msra.mxu0 %v1852
      %1877 = vmatprep.subr.bf16.mxu0 0
      %1878 = vmatpush1.bf16.msra.mxu0 0
      %1879 = vmatprep.subr.bf16.mxu0 0
      %1880 = vmatpush1.bf16.msra.mxu0 0
      %1881 = vmatprep.subr.bf16.mxu0 0
      %1882 = vmatpush1.bf16.msra.mxu0 0
      %1883 = vmatprep.subr.bf16.mxu0 0
      %1884 = vmatpush1.bf16.msra.mxu0 0
      %1885 = vmatprep.subr.bf16.mxu0 0
      %1886 = vmatpush1.bf16.msra.mxu0 0
      %1887 = vmatprep.subr.bf16.mxu0 0
      %1888 = vmatpush1.bf16.msra.mxu0 0
      %1889 = vmatprep.subr.bf16.mxu0 0
      %1890 = vmatpush1.bf16.msra.mxu0 0
      %1891 = vmatprep.subr.bf16.mxu0 0
      %1892 = vmatpush1.bf16.msra.mxu0 0
      %1893 = vmatprep.mubr.bf16.mxu0 0
      %1894 = vmatmul.mubr.bf16.gmra.mrb[0].mxu0 %v1774
      %v1895 = vpop.f32.mrb[0].mxu0
      %v1896 = vadd.f32 %v1811, %v1895
      %v1897 = vpop.f32.mrb[0].mxu0
      %v1898 = vpop.f32.mrb[0].mxu0
      %v1899 = vadd.f32 %v1811, %v1898
      %v1900 = vpop.f32.mrb[0].mxu0
      %1901 = vmatprep.mubr.bf16.mxu0 0
      %1902 = vmatmul.mubr.bf16.gmra.mrb[0].mxu0 %v1775
      %v1903 = vpop.f32.mrb[0].mxu0
      %v1904 = vadd.f32 %v1811, %v1903
      %v1905 = vpop.f32.mrb[0].mxu0
      %v1906 = vpop.f32.mrb[0].mxu0
      %v1907 = vadd.f32 %v1811, %v1906
      %v1908 = vpop.f32.mrb[0].mxu0
      %1909 = vmatprep.mubr.bf16.mxu0 0
      %1910 = vmatmul.mubr.bf16.gmra.mrb[0].mxu0 %v1776
      %v1911 = vpop.f32.mrb[0].mxu0
      %v1912 = vadd.f32 %v1811, %v1911
      %v1913 = vpop.f32.mrb[0].mxu0
      %v1914 = vpop.f32.mrb[0].mxu0
      %v1915 = vadd.f32 %v1811, %v1914
      %v1916 = vpop.f32.mrb[0].mxu0
      %1917 = vmatprep.mubr.bf16.mxu0 0
      %1918 = vmatmul.mubr.bf16.gmra.mrb[0].mxu0 %v1777
      %v1919 = vpop.f32.mrb[0].mxu0
      %v1920 = vadd.f32 %v1811, %v1919
      %v1921 = vpop.f32.mrb[0].mxu0
      %v1922 = vpop.f32.mrb[0].mxu0
      %v1923 = vadd.f32 %v1811, %v1922
      %v1924 = vpop.f32.mrb[0].mxu0
      %1925 = vmatprep.mubr.bf16.mxu0 0
      %1926 = vmatmul.mubr.bf16.gmra.mrb[0].mxu0 %v1778
      %v1927 = vpop.f32.mrb[0].mxu0
      %v1928 = vadd.f32 %v1811, %v1927
      %v1929 = vpop.f32.mrb[0].mxu0
      %v1930 = vpop.f32.mrb[0].mxu0
      %v1931 = vadd.f32 %v1811, %v1930
      %v1932 = vpop.f32.mrb[0].mxu0
      %1933 = vmatprep.mubr.bf16.mxu0 0
      %1934 = vmatmul.mubr.bf16.gmra.mrb[0].mxu0 %v1779
      %v1935 = vpop.f32.mrb[0].mxu0
      %v1936 = vadd.f32 %v1811, %v1935
      %v1937 = vpop.f32.mrb[0].mxu0
      %v1938 = vpop.f32.mrb[0].mxu0
      %v1939 = vadd.f32 %v1811, %v1938
      %v1940 = vpop.f32.mrb[0].mxu0
      %1941 = vmatprep.mubr.bf16.mxu0 0
      %1942 = vmatmul.mubr.bf16.gmra.mrb[0].mxu0 %v1780
      %v1943 = vpop.f32.mrb[0].mxu0
      %v1944 = vadd.f32 %v1811, %v1943
      %v1945 = vpop.f32.mrb[0].mxu0
      %v1946 = vpop.f32.mrb[0].mxu0
      %v1947 = vadd.f32 %v1811, %v1946
      %v1948 = vpop.f32.mrb[0].mxu0
      %1949 = vmatprep.mubr.bf16.mxu0 0
      %1950 = vmatmul.mubr.bf16.gmra.mrb[0].mxu0 %v1781
      %v1951 = vpop.f32.mrb[0].mxu0
      %v1952 = vadd.f32 %v1811, %v1951
      %v1953 = vpop.f32.mrb[0].mxu0
      %v1954 = vpop.f32.mrb[0].mxu0
      %v1955 = vadd.f32 %v1811, %v1954
      %v1956 = vpop.f32.mrb[0].mxu0
      %1957 = vmatprep.mubr.bf16.mxu0 0
      %1958 = vmatmul.mubr.bf16.gmra.mrb[0].mxu0 %v1782
      %v1959 = vpop.f32.mrb[0].mxu0
      %v1960 = vadd.f32 %v1811, %v1959
      %v1961 = vpop.f32.mrb[0].mxu0
      %v1962 = vpop.f32.mrb[0].mxu0
      %v1963 = vadd.f32 %v1811, %v1962
      %v1964 = vpop.f32.mrb[0].mxu0
      %1965 = vmatprep.mubr.bf16.mxu0 0
      %1966 = vmatmul.mubr.bf16.gmra.mrb[0].mxu0 %v1783
      %v1967 = vpop.f32.mrb[0].mxu0
      %v1968 = vadd.f32 %v1811, %v1967
      %v1969 = vpop.f32.mrb[0].mxu0
      %v1970 = vpop.f32.mrb[0].mxu0
      %v1971 = vadd.f32 %v1811, %v1970
      %v1972 = vpop.f32.mrb[0].mxu0
      %1973 = vmatprep.mubr.bf16.mxu0 0
      %1974 = vmatmul.mubr.bf16.gmra.mrb[0].mxu0 %v1784
      %v1975 = vpop.f32.mrb[0].mxu0
      %v1976 = vadd.f32 %v1811, %v1975
      %v1977 = vpop.f32.mrb[0].mxu0
      %v1978 = vpop.f32.mrb[0].mxu0
      %v1979 = vadd.f32 %v1811, %v1978
      %v1980 = vpop.f32.mrb[0].mxu0
      %1981 = vmatprep.mubr.bf16.mxu0 0
      %1982 = vmatmul.mubr.bf16.gmra.mrb[0].mxu0 %v1785
      %v1983 = vpop.f32.mrb[0].mxu0
      %v1984 = vadd.f32 %v1811, %v1983
      %v1985 = vpop.f32.mrb[0].mxu0
      %v1986 = vpop.f32.mrb[0].mxu0
      %v1987 = vadd.f32 %v1811, %v1986
      %v1988 = vpop.f32.mrb[0].mxu0
      %1989 = vmatprep.mubr.bf16.mxu0 0
      %1990 = vmatmul.mubr.bf16.gmra.mrb[0].mxu0 %v1786
      %v1991 = vpop.f32.mrb[0].mxu0
      %v1992 = vadd.f32 %v1811, %v1991
      %v1993 = vpop.f32.mrb[0].mxu0
      %v1994 = vpop.f32.mrb[0].mxu0
      %v1995 = vadd.f32 %v1811, %v1994
      %v1996 = vpop.f32.mrb[0].mxu0
      %1997 = vmatprep.mubr.bf16.mxu0 0
      %1998 = vmatmul.mubr.bf16.gmra.mrb[0].mxu0 %v1787
      %v1999 = vpop.f32.mrb[0].mxu0
      %v2000 = vadd.f32 %v1811, %v1999
      %v2001 = vpop.f32.mrb[0].mxu0
      %v2002 = vpop.f32.mrb[0].mxu0
      %v2003 = vadd.f32 %v1811, %v2002
      %v2004 = vpop.f32.mrb[0].mxu0
      %2005 = vmatprep.mubr.bf16.mxu0 0
      %2006 = vmatmul.mubr.bf16.gmra.mrb[0].mxu0 %v1788
      %v2007 = vpop.f32.mrb[0].mxu0
      %v2008 = vadd.f32 %v1811, %v2007
      %v2009 = vpop.f32.mrb[0].mxu0
      %v2010 = vpop.f32.mrb[0].mxu0
      %v2011 = vadd.f32 %v1811, %v2010
      %v2012 = vpop.f32.mrb[0].mxu0
      %2013 = vmatprep.mubr.bf16.mxu0 0
      %2014 = vmatmul.mubr.bf16.gmra.mrb[0].mxu0 %v1789
      %v2015 = vpop.f32.mrb[0].mxu0
      %v2016 = vadd.f32 %v1811, %v2015
      %v2017 = vpop.f32.mrb[0].mxu0
      %v2018 = vpop.f32.mrb[0].mxu0
      %v2019 = vadd.f32 %v1811, %v2018
      %v2020 = vpop.f32.mrb[0].mxu0
      %2021 = vdwg.mxu0
      %v2022 = vadd.f32 %v1896, %v226
      %v2023 = vadd.f32 %v1899, %v227
      %v2024 = vadd.f32 %v1904, %v228
      %v2025 = vadd.f32 %v1907, %v229
      %v2026 = vadd.f32 %v1912, %v230
      %v2027 = vadd.f32 %v1915, %v231
      %v2028 = vadd.f32 %v1920, %v232
      %v2029 = vadd.f32 %v1923, %v233
      %v2030 = vadd.f32 %v1928, %v234
      %v2031 = vadd.f32 %v1931, %v235
      %v2032 = vadd.f32 %v1936, %v236
      %v2033 = vadd.f32 %v1939, %v237
      %v2034 = vadd.f32 %v1944, %v238
      %v2035 = vadd.f32 %v1947, %v239
      %v2036 = vadd.f32 %v1952, %v240
      %v2037 = vadd.f32 %v1955, %v241
      %v2038 = vadd.f32 %v1960, %v242
      %v2039 = vadd.f32 %v1963, %v243
      %v2040 = vadd.f32 %v1968, %v244
      %v2041 = vadd.f32 %v1971, %v245
      %v2042 = vadd.f32 %v1976, %v246
      %v2043 = vadd.f32 %v1979, %v247
      %v2044 = vadd.f32 %v1984, %v248
      %v2045 = vadd.f32 %v1987, %v249
      %v2046 = vadd.f32 %v1992, %v250
      %v2047 = vadd.f32 %v1995, %v251
      %v2048 = vadd.f32 %v2000, %v252
      %v2049 = vadd.f32 %v2003, %v253
      %v2050 = vadd.f32 %v2008, %v254
      %v2051 = vadd.f32 %v2011, %v255
      %v2052 = vadd.f32 %v2016, %v256
      %v2053 = vadd.f32 %v2019, %v257
      %2054 = vst.msk [vmem:[%s224] sm:$0xff] %vm371, %v2022
      %2055 = vst.msk [vmem:[%s224 + $0x8] sm:$0xff] %vm371, %v2023
      %2056 = vst.msk [vmem:[%s224 + $0x10] sm:$0xff] %vm371, %v2024
      %2057 = vst.msk [vmem:[%s224 + $0x18] sm:$0xff] %vm371, %v2025
      %2058 = vst.msk [vmem:[%s224 + $0x20] sm:$0xff] %vm371, %v2026
      %2059 = vst.msk [vmem:[%s224 + $0x28] sm:$0xff] %vm371, %v2027
      %2060 = vst.msk [vmem:[%s224 + $0x30] sm:$0xff] %vm371, %v2028
      %2061 = vst.msk [vmem:[%s224 + $0x38] sm:$0xff] %vm371, %v2029
      %2062 = vst.msk [vmem:[%s224 + $0x40] sm:$0xff] %vm371, %v2030
      %2063 = vst.msk [vmem:[%s224 + $0x48] sm:$0xff] %vm371, %v2031
      %2064 = vst.msk [vmem:[%s224 + $0x50] sm:$0xff] %vm371, %v2032
      %2065 = vst.msk [vmem:[%s224 + $0x58] sm:$0xff] %vm371, %v2033
      %2066 = vst.msk [vmem:[%s224 + $0x60] sm:$0xff] %vm371, %v2034
      %2067 = vst.msk [vmem:[%s224 + $0x68] sm:$0xff] %vm371, %v2035
      %2068 = vst.msk [vmem:[%s224 + $0x70] sm:$0xff] %vm371, %v2036
      %2069 = vst.msk [vmem:[%s224 + $0x78] sm:$0xff] %vm371, %v2037
      %2070 = vst.msk [vmem:[%s224 + $0x80] sm:$0xff] %vm371, %v2038
      %2071 = vst.msk [vmem:[%s224 + $0x88] sm:$0xff] %vm371, %v2039
      %2072 = vst.msk [vmem:[%s224 + $0x90] sm:$0xff] %vm371, %v2040
      %2073 = vst.msk [vmem:[%s224 + $0x98] sm:$0xff] %vm371, %v2041
      %2074 = vst.msk [vmem:[%s224 + $0xa0] sm:$0xff] %vm371, %v2042
      %2075 = vst.msk [vmem:[%s224 + $0xa8] sm:$0xff] %vm371, %v2043
      %2076 = vst.msk [vmem:[%s224 + $0xb0] sm:$0xff] %vm371, %v2044
      %2077 = vst.msk [vmem:[%s224 + $0xb8] sm:$0xff] %vm371, %v2045
      %2078 = vst.msk [vmem:[%s224 + $0xc0] sm:$0xff] %vm371, %v2046
      %2079 = vst.msk [vmem:[%s224 + $0xc8] sm:$0xff] %vm371, %v2047
      %2080 = vst.msk [vmem:[%s224 + $0xd0] sm:$0xff] %vm371, %v2048
      %2081 = vst.msk [vmem:[%s224 + $0xd8] sm:$0xff] %vm371, %v2049
      %2082 = vst.msk [vmem:[%s224 + $0xe0] sm:$0xff] %vm371, %v2050
      %2083 = vst.msk [vmem:[%s224 + $0xe8] sm:$0xff] %vm371, %v2051
      %2084 = vst.msk [vmem:[%s224 + $0xf0] sm:$0xff] %vm371, %v2052
      %2085 = vst.msk [vmem:[%s224 + $0xf8] sm:$0xff] %vm371, %v2053
      %p2086 = scmp.lt.s32.totalorder %s16, 1
      %s2087 = scalar_select %p2086, %s16, 1
      %s2088 = smul.addr %s2087, 32
      %s2089 = smul.addr %s2088, 8
      %s2090 = scalar_lea.vmem %s5, %s2089
      // Predicated region
      $region41: #{_nonlocal_ca_forward.1} parent=39 // pred_check
        %p2091 = pneg %p144
      $region42: #{_nonlocal_ca_forward.1} parent=39 // pred_check_branch
        %2093 = sbr.rel (%p2091) target = $region44
      $region43: #{_nonlocal_ca_forward.1} parent=39 // pred_region
        _
      $region44: #{_nonlocal_ca_forward.1} parent=39 // pred_fallthru
        _
    $region40: #{_nonlocal_ca_forward.1} parent=5 // pred_fallthru
      _
    %p2094 = scmp.le.s32.totalorder 2, %s11
    // Predicated region
    $region45: #{_nonlocal_ca_forward.1} parent=5 // pred_check
      %p2095 = pneg %p2094
    $region46: #{_nonlocal_ca_forward.1} parent=5 // pred_check_branch
      %2097 = sbr.rel (%p2095) target = $region48
    $region47: #{_nonlocal_ca_forward.1} parent=5 // pred_region
      %s2098 = ssub.s32 %s11, 2
      // Predicated region
      $region49: #{_nonlocal_ca_forward.1} parent=47 // pred_check
        %p2099 = pneg %p150
      $region50: #{_nonlocal_ca_forward.1} parent=47 // pred_check_branch
        %2101 = sbr.rel (%p2099) target = $region52
      $region51: #{_nonlocal_ca_forward.1} parent=47 // pred_region
        %p2102 = scmp.lt.s32.totalorder %s17, 1
        %s2103 = scalar_select %p2102, %s17, 1
        %s2104 = smul.addr %s2103, 32
        %s2105 = smul.addr %s2104, 8
        %s2106 = scalar_lea.vmem %s5, %s2105
      $region52: #{_nonlocal_ca_forward.1} parent=47 // pred_fallthru
        _
    $region48: #{_nonlocal_ca_forward.1} parent=5 // pred_fallthru
      _
  $region6: #{_nonlocal_ca_forward.1} parent=0 // loop_footer
    %s15 = sadd.s32 1, %s11
  $region7: #{_nonlocal_ca_forward.1} parent=0 // loop_footer_branch
    %10 = sbr.rel target = $region3
  $region8: #{_nonlocal_ca_forward.1} parent=0 // loop_exit
    _

</llo_original>
